<compile_context>
chip_gen: v7x
topology: tpu7x:2x2x1
jax: 0.10.0
libtpu: 0.0.40
codegen_flags: <defaults>
</compile_context>

<pallas_src>
import functools

import jax
import jax.numpy as jnp
from jax import lax
from jax.experimental import pallas as pl
from jax.experimental.pallas import tpu as pltpu


def mha_kernel(x_ref, wqkv_ref, wp_ref, bp_ref, o_ref, *, num_heads, pad_head):
    """One grid step handles one batch element.

    x_ref    : (1, T, D)        bf16  input tokens
    wqkv_ref : (D, 3*H*P)       bf16  fused per-head QKV weights, each head's
                                      block zero-padded to P lanes; the softmax
                                      scale is already folded into the Q columns
    wp_ref   : (H*P, D)         bf16  output projection (transposed, row-padded
                                      to match the padded head-output layout)
    bp_ref   : (1, D)           f32   output projection bias
    o_ref    : (1, T, D)        bf16  output
    """
    x = x_ref[0]                                   # (T, D) bf16
    T = x.shape[0]
    H, P = num_heads, pad_head
    HP = H * P

    # Fused QKV projection for all heads: one lane-dense MXU matmul with f32
    # accumulation, then a single bf16 cast (review item: cast once).
    qkv = jnp.dot(x, wqkv_ref[...],
                  preferred_element_type=jnp.float32).astype(jnp.bfloat16)   # (T, 3*HP)

    # Causal mask, built once and reused by every head.
    row = lax.broadcasted_iota(jnp.int32, (T, T), 0)
    col = lax.broadcasted_iota(jnp.int32, (T, T), 1)
    causal = col <= row
    neg_big = jnp.float32(-1e30)     # large finite negative (NaN-safe vs. -inf)

    head_outs = []
    # H is small & static here -> unrolled at trace time. For H >~ 8 use
    # lax.fori_loop(..., unroll=k) or a head grid axis (review item 12).
    for h in range(H):
        # 128-lane-aligned, 128-multiple-wide slices: true views, no relayout.
        q = qkv[:, h * P:(h + 1) * P]                        # (T, P)
        k = qkv[:, HP + h * P:HP + (h + 1) * P]              # (T, P)
        v = qkv[:, 2 * HP + h * P:2 * HP + (h + 1) * P]      # (T, P)

        # scores = q @ k^T (contract the padded lane dim; zero pad lanes add 0).
        # Scale is pre-folded into the Q weights -> no (T,T) multiply here.
        s = lax.dot_general(q, k, (((1,), (1,)), ((), ())),
                            preferred_element_type=jnp.float32)             # (T, T)
        s = jnp.where(causal, s, neg_big)

        # Numerically-stable softmax in f32; the divide goes to the EUP.
        s = s - jnp.max(s, axis=-1, keepdims=True)
        e = jnp.exp(s)
        inv = pl.reciprocal(jnp.sum(e, axis=-1, keepdims=True), approx=True)
        p = (e * inv).astype(jnp.bfloat16)

        head_outs.append(
            jnp.dot(p, v, preferred_element_type=jnp.float32)
            .astype(jnp.bfloat16))                                           # (T, P)

    # Stage all head outputs (lane-aligned concat of 128-wide blocks), then a
    # SINGLE output projection with contraction depth H*P (review item 2).
    ho = jnp.concatenate(head_outs, axis=-1)                                  # (T, H*P)
    out = jnp.dot(ho, wp_ref[...], preferred_element_type=jnp.float32)        # (T, D) f32
    out = out + bp_ref[...]                                                   # bias in f32
    o_ref[0] = out.astype(o_ref.dtype)                                        # bf16 store


def multi_head_attention(x, wq, wk, wv, w_proj, b_proj):
    """x: (B, T, D); wq/wk/wv: (H, D, Hs); w_proj: (D, H*Hs) [torch (out,in)]; b_proj: (D,)."""
    B, T, D = x.shape
    H, _, Hs = wq.shape

    # Pad each head's block to a 128-lane boundary so in-kernel slices are
    # aligned views. No-op when Hs is already a multiple of 128.
    P = 128 * ((Hs + 127) // 128)

    # NOTE: the PyTorch module scales scores by dim_embed**-0.5 (not
    # head_size**-0.5); we match that intentionally, folded into the Q weights.
    scale = D ** (-0.5)

    def pad_heads(w, s=1.0):                  # (H, D, Hs) -> (D, H*P), zero-padded
        w = w * s
        w = jnp.pad(w, ((0, 0), (0, 0), (0, P - Hs)))          # (H, D, P)
        return jnp.transpose(w, (1, 0, 2)).reshape(D, H * P)

    w_qkv = jnp.concatenate(
        [pad_heads(wq, scale), pad_heads(wk), pad_heads(wv)],
        axis=-1).astype(jnp.bfloat16)                           # (D, 3*H*P)

    # Output projection: torch layout (D, H*Hs) -> transpose to (H*Hs, D), then
    # zero-pad each head's row block to P rows to match the padded staging layout.
    wp_t = jnp.transpose(w_proj).reshape(H, Hs, D)              # (H, Hs, D)
    wp_t = jnp.pad(wp_t, ((0, 0), (0, P - Hs), (0, 0)))         # (H, P, D)
    wp_t = wp_t.reshape(H * P, D).astype(jnp.bfloat16)          # (H*P, D)

    b2 = b_proj.reshape(1, D).astype(jnp.float32)
    x_bf = x.astype(jnp.bfloat16)

    kernel = functools.partial(mha_kernel, num_heads=H, pad_head=P)

    return pl.pallas_call(
        kernel,
        out_shape=jax.ShapeDtypeStruct((B, T, D), jnp.bfloat16),   # bf16 writeback
        grid_spec=pltpu.PrefetchScalarGridSpec(
            num_scalar_prefetch=0,
            grid=(B,),
            in_specs=[
                pl.BlockSpec((1, T, D), lambda b: (b, 0, 0)),      # x (per-batch tile)
                # Constant-index weight blocks: DMA'd once, VMEM-resident.
                # TODO(synk): at production D/H/Hs, tile the D contraction axis
                # of these instead of keeping them fully resident (v7x VMEM).
                pl.BlockSpec((D, 3 * H * P), lambda b: (0, 0)),    # fused Wqkv (padded)
                pl.BlockSpec((H * P, D), lambda b: (0, 0)),        # W_proj^T (padded)
                pl.BlockSpec((1, D), lambda b: (0, 0)),            # bias
            ],
            out_specs=pl.BlockSpec((1, T, D), lambda b: (b, 0, 0)),
        ),
        compiler_params=pltpu.CompilerParams(
            dimension_semantics=("parallel",)),
    )(x_bf, w_qkv, wp_t, b2)


def reference_mha(x, wq, wk, wv, w_proj, b_proj):
    """Pure-JAX f32 reference mirroring the PyTorch forward exactly."""
    B, T, D = x.shape
    H = wq.shape[0]
    scale = D ** (-0.5)
    mask = jnp.tril(jnp.ones((T, T), dtype=bool))
    outs = []
    for h in range(H):
        q = x @ wq[h]
        k = x @ wk[h]
        v = x @ wv[h]
        w = (q @ jnp.swapaxes(k, -1, -2)) * scale
        w = jnp.where(mask, w, -jnp.inf)
        w = jax.nn.softmax(w, axis=-1)
        outs.append(w @ v)
    cat = jnp.concatenate(outs, axis=-1)
    return cat @ w_proj.T + b_proj


if __name__ == "__main__":
    # Small shapes consistent with the module's forward.
    B, T = 2, 8
    dim_embed = 32
    num_heads = 4
    head_size = 8

    key = jax.random.PRNGKey(0)
    kx, kq, kk, kv, kp, kb = jax.random.split(key, 6)

    x = jax.random.normal(kx, (B, T, dim_embed), dtype=jnp.float32)
    # Stacked per-head projection weights (H, D, Hs)  ==  Linear.weight.T per head.
    wq = jax.random.normal(kq, (num_heads, dim_embed, head_size), dtype=jnp.float32) * 0.1
    wk = jax.random.normal(kk, (num_heads, dim_embed, head_size), dtype=jnp.float32) * 0.1
    wv = jax.random.normal(kv, (num_heads, dim_embed, head_size), dtype=jnp.float32) * 0.1
    # Output projection in PyTorch Linear layout: (out_features, in_features) + bias.
    w_proj = jax.random.normal(kp, (dim_embed, num_heads * head_size), dtype=jnp.float32) * 0.1
    b_proj = jax.random.normal(kb, (dim_embed,), dtype=jnp.float32) * 0.1

    out = multi_head_attention(x, wq, wk, wv, w_proj, b_proj)
    out = jax.block_until_ready(out)

    ref = reference_mha(x, wq, wk, wv, w_proj, b_proj)
    assert out.shape == (B, T, dim_embed)
    out_f32 = out.astype(jnp.float32)
    # bf16 MXU inputs with f32 accumulation + approx reciprocal + bf16 output
    # -> relaxed tolerance vs. the pure-f32 reference.
    max_err = float(jnp.max(jnp.abs(out_f32 - ref)))
    assert jnp.allclose(out_f32, ref, atol=5e-2, rtol=5e-2), \
        f"mismatch vs reference (max_err={max_err})"

    print("KERNEL_OK")
</pallas_src>

<mosaic_0001>
module attributes {stable_mosaic.version = 11 : i64} {
  func.func @mha_kernel(%arg0: i32, %arg1: memref<1x8x32xbf16, #tpu.memory_space<vmem>>, %arg2: memref<32x1536xbf16, #tpu.memory_space<vmem>>, %arg3: memref<512x32xbf16, #tpu.memory_space<vmem>>, %arg4: memref<1x32xf32, #tpu.memory_space<vmem>>, %arg5: memref<1x8x32xbf16, #tpu.memory_space<vmem>>) attributes {dimension_semantics = [#tpu.dimension_semantics<parallel>], iteration_bounds = array<i64: 2>, scalar_prefetch = 0 : i64, scratch_operands = 0 : i64, tpu.core_type = #tpu.core_type<tc>, window_params = [{transform_indices = @transform_0, window_bounds = array<i64: 1, 8, 32>}, {pipeline_mode = #tpu.pipeline_mode<synchronous>, transform_indices = @transform_1, window_bounds = array<i64: 32, 1536>}, {pipeline_mode = #tpu.pipeline_mode<synchronous>, transform_indices = @transform_2, window_bounds = array<i64: 512, 32>}, {pipeline_mode = #tpu.pipeline_mode<synchronous>, transform_indices = @transform_3, window_bounds = array<i64: 1, 32>}, {transform_indices = @transform_4, window_bounds = array<i64: 1, 8, 32>}]} {
    %c0 = arith.constant 0 : index
    %c0_0 = arith.constant 0 : index
    %c0_1 = arith.constant 0 : index
    %0 = vector.load %arg1[%c0, %c0_0, %c0_1] : memref<1x8x32xbf16, #tpu.memory_space<vmem>>, vector<1x8x32xbf16>
    %1 = vector.shape_cast %0 : vector<1x8x32xbf16> to vector<8x32xbf16>
    %c0_2 = arith.constant 0 : index
    %c0_3 = arith.constant 0 : index
    %2 = vector.load %arg2[%c0_2, %c0_3] : memref<32x1536xbf16, #tpu.memory_space<vmem>>, vector<32x1536xbf16>
    %cst = arith.constant dense<0.000000e+00> : vector<8x1536xf32>
    %3 = tpu.matmul %1, %2, %cst {dimension_numbers = #tpu.dot_dimension_numbers<[1], [0], [0], [1], [0, 0, 1, 1], [], []>} : vector<8x32xbf16>, vector<32x1536xbf16>, vector<8x1536xf32> -> vector<8x1536xf32>
    %4 = arith.truncf %3 : vector<8x1536xf32> to vector<8x1536xbf16>
    %5 = tpu.iota {dimensions = array<i32: 0>} : vector<8x8xi32>
    %6 = tpu.iota {dimensions = array<i32: 1>} : vector<8x8xi32>
    %7 = arith.cmpi sle, %6, %5 : vector<8x8xi32>
    %8 = vector.extract_strided_slice %4 {offsets = [0, 0], sizes = [8, 128], strides = [1, 1]} : vector<8x1536xbf16> to vector<8x128xbf16>
    %9 = vector.extract_strided_slice %4 {offsets = [0, 512], sizes = [8, 128], strides = [1, 1]} : vector<8x1536xbf16> to vector<8x128xbf16>
    %10 = vector.extract_strided_slice %4 {offsets = [0, 1024], sizes = [8, 128], strides = [1, 1]} : vector<8x1536xbf16> to vector<8x128xbf16>
    %cst_4 = arith.constant dense<0.000000e+00> : vector<8x8xf32>
    %11 = tpu.matmul %8, %9, %cst_4 {dimension_numbers = #tpu.dot_dimension_numbers<[1], [1], [0], [0], [0, 0, 1, 0], [], []>} : vector<8x128xbf16>, vector<8x128xbf16>, vector<8x8xf32> -> vector<8x8xf32>
    %cst_5 = arith.constant -1.000000e+30 : f32
    %12 = vector.broadcast %cst_5 : f32 to vector<8x8xf32>
    %13 = arith.select %7, %11, %12 : vector<8x8xi1>, vector<8x8xf32>
    %cst_6 = arith.constant dense<0xFF800000> : vector<8xf32>
    %14 = vector.multi_reduction <maximumf>, %13, %cst_6 [1] : vector<8x8xf32> to vector<8xf32>
    %15 = vector.shape_cast %14 : vector<8xf32> to vector<8x1xf32>
    %16 = vector.broadcast %15 : vector<8x1xf32> to vector<8x8xf32>
    %17 = arith.subf %13, %16 : vector<8x8xf32>
    %18 = math.exp %17 : vector<8x8xf32>
    %cst_7 = arith.constant dense<0.000000e+00> : vector<8xf32>
    %19 = vector.multi_reduction <add>, %18, %cst_7 [1] : vector<8x8xf32> to vector<8xf32>
    %20 = vector.shape_cast %19 : vector<8xf32> to vector<8x1xf32>
    %21 = tpu.reciprocal %20 {approx = true} : vector<8x1xf32> -> vector<8x1xf32>
    %22 = vector.broadcast %21 : vector<8x1xf32> to vector<8x8xf32>
    %23 = arith.mulf %18, %22 : vector<8x8xf32>
    %24 = arith.truncf %23 : vector<8x8xf32> to vector<8x8xbf16>
    %cst_8 = arith.constant dense<0.000000e+00> : vector<8x128xf32>
    %25 = tpu.matmul %24, %10, %cst_8 {dimension_numbers = #tpu.dot_dimension_numbers<[1], [0], [0], [1], [0, 0, 1, 1], [], []>} : vector<8x8xbf16>, vector<8x128xbf16>, vector<8x128xf32> -> vector<8x128xf32>
    %26 = arith.truncf %25 : vector<8x128xf32> to vector<8x128xbf16>
    %27 = vector.extract_strided_slice %4 {offsets = [0, 128], sizes = [8, 128], strides = [1, 1]} : vector<8x1536xbf16> to vector<8x128xbf16>
    %28 = vector.extract_strided_slice %4 {offsets = [0, 640], sizes = [8, 128], strides = [1, 1]} : vector<8x1536xbf16> to vector<8x128xbf16>
    %29 = vector.extract_strided_slice %4 {offsets = [0, 1152], sizes = [8, 128], strides = [1, 1]} : vector<8x1536xbf16> to vector<8x128xbf16>
    %cst_9 = arith.constant dense<0.000000e+00> : vector<8x8xf32>
    %30 = tpu.matmul %27, %28, %cst_9 {dimension_numbers = #tpu.dot_dimension_numbers<[1], [1], [0], [0], [0, 0, 1, 0], [], []>} : vector<8x128xbf16>, vector<8x128xbf16>, vector<8x8xf32> -> vector<8x8xf32>
    %cst_10 = arith.constant -1.000000e+30 : f32
    %31 = vector.broadcast %cst_10 : f32 to vector<8x8xf32>
    %32 = arith.select %7, %30, %31 : vector<8x8xi1>, vector<8x8xf32>
    %cst_11 = arith.constant dense<0xFF800000> : vector<8xf32>
    %33 = vector.multi_reduction <maximumf>, %32, %cst_11 [1] : vector<8x8xf32> to vector<8xf32>
    %34 = vector.shape_cast %33 : vector<8xf32> to vector<8x1xf32>
    %35 = vector.broadcast %34 : vector<8x1xf32> to vector<8x8xf32>
    %36 = arith.subf %32, %35 : vector<8x8xf32>
    %37 = math.exp %36 : vector<8x8xf32>
    %cst_12 = arith.constant dense<0.000000e+00> : vector<8xf32>
    %38 = vector.multi_reduction <add>, %37, %cst_12 [1] : vector<8x8xf32> to vector<8xf32>
    %39 = vector.shape_cast %38 : vector<8xf32> to vector<8x1xf32>
    %40 = tpu.reciprocal %39 {approx = true} : vector<8x1xf32> -> vector<8x1xf32>
    %41 = vector.broadcast %40 : vector<8x1xf32> to vector<8x8xf32>
    %42 = arith.mulf %37, %41 : vector<8x8xf32>
    %43 = arith.truncf %42 : vector<8x8xf32> to vector<8x8xbf16>
    %cst_13 = arith.constant dense<0.000000e+00> : vector<8x128xf32>
    %44 = tpu.matmul %43, %29, %cst_13 {dimension_numbers = #tpu.dot_dimension_numbers<[1], [0], [0], [1], [0, 0, 1, 1], [], []>} : vector<8x8xbf16>, vector<8x128xbf16>, vector<8x128xf32> -> vector<8x128xf32>
    %45 = arith.truncf %44 : vector<8x128xf32> to vector<8x128xbf16>
    %46 = vector.extract_strided_slice %4 {offsets = [0, 256], sizes = [8, 128], strides = [1, 1]} : vector<8x1536xbf16> to vector<8x128xbf16>
    %47 = vector.extract_strided_slice %4 {offsets = [0, 768], sizes = [8, 128], strides = [1, 1]} : vector<8x1536xbf16> to vector<8x128xbf16>
    %48 = vector.extract_strided_slice %4 {offsets = [0, 1280], sizes = [8, 128], strides = [1, 1]} : vector<8x1536xbf16> to vector<8x128xbf16>
    %cst_14 = arith.constant dense<0.000000e+00> : vector<8x8xf32>
    %49 = tpu.matmul %46, %47, %cst_14 {dimension_numbers = #tpu.dot_dimension_numbers<[1], [1], [0], [0], [0, 0, 1, 0], [], []>} : vector<8x128xbf16>, vector<8x128xbf16>, vector<8x8xf32> -> vector<8x8xf32>
    %cst_15 = arith.constant -1.000000e+30 : f32
    %50 = vector.broadcast %cst_15 : f32 to vector<8x8xf32>
    %51 = arith.select %7, %49, %50 : vector<8x8xi1>, vector<8x8xf32>
    %cst_16 = arith.constant dense<0xFF800000> : vector<8xf32>
    %52 = vector.multi_reduction <maximumf>, %51, %cst_16 [1] : vector<8x8xf32> to vector<8xf32>
    %53 = vector.shape_cast %52 : vector<8xf32> to vector<8x1xf32>
    %54 = vector.broadcast %53 : vector<8x1xf32> to vector<8x8xf32>
    %55 = arith.subf %51, %54 : vector<8x8xf32>
    %56 = math.exp %55 : vector<8x8xf32>
    %cst_17 = arith.constant dense<0.000000e+00> : vector<8xf32>
    %57 = vector.multi_reduction <add>, %56, %cst_17 [1] : vector<8x8xf32> to vector<8xf32>
    %58 = vector.shape_cast %57 : vector<8xf32> to vector<8x1xf32>
    %59 = tpu.reciprocal %58 {approx = true} : vector<8x1xf32> -> vector<8x1xf32>
    %60 = vector.broadcast %59 : vector<8x1xf32> to vector<8x8xf32>
    %61 = arith.mulf %56, %60 : vector<8x8xf32>
    %62 = arith.truncf %61 : vector<8x8xf32> to vector<8x8xbf16>
    %cst_18 = arith.constant dense<0.000000e+00> : vector<8x128xf32>
    %63 = tpu.matmul %62, %48, %cst_18 {dimension_numbers = #tpu.dot_dimension_numbers<[1], [0], [0], [1], [0, 0, 1, 1], [], []>} : vector<8x8xbf16>, vector<8x128xbf16>, vector<8x128xf32> -> vector<8x128xf32>
    %64 = arith.truncf %63 : vector<8x128xf32> to vector<8x128xbf16>
    %65 = vector.extract_strided_slice %4 {offsets = [0, 384], sizes = [8, 128], strides = [1, 1]} : vector<8x1536xbf16> to vector<8x128xbf16>
    %66 = vector.extract_strided_slice %4 {offsets = [0, 896], sizes = [8, 128], strides = [1, 1]} : vector<8x1536xbf16> to vector<8x128xbf16>
    %67 = vector.extract_strided_slice %4 {offsets = [0, 1408], sizes = [8, 128], strides = [1, 1]} : vector<8x1536xbf16> to vector<8x128xbf16>
    %cst_19 = arith.constant dense<0.000000e+00> : vector<8x8xf32>
    %68 = tpu.matmul %65, %66, %cst_19 {dimension_numbers = #tpu.dot_dimension_numbers<[1], [1], [0], [0], [0, 0, 1, 0], [], []>} : vector<8x128xbf16>, vector<8x128xbf16>, vector<8x8xf32> -> vector<8x8xf32>
    %cst_20 = arith.constant -1.000000e+30 : f32
    %69 = vector.broadcast %cst_20 : f32 to vector<8x8xf32>
    %70 = arith.select %7, %68, %69 : vector<8x8xi1>, vector<8x8xf32>
    %cst_21 = arith.constant dense<0xFF800000> : vector<8xf32>
    %71 = vector.multi_reduction <maximumf>, %70, %cst_21 [1] : vector<8x8xf32> to vector<8xf32>
    %72 = vector.shape_cast %71 : vector<8xf32> to vector<8x1xf32>
    %73 = vector.broadcast %72 : vector<8x1xf32> to vector<8x8xf32>
    %74 = arith.subf %70, %73 : vector<8x8xf32>
    %75 = math.exp %74 : vector<8x8xf32>
    %cst_22 = arith.constant dense<0.000000e+00> : vector<8xf32>
    %76 = vector.multi_reduction <add>, %75, %cst_22 [1] : vector<8x8xf32> to vector<8xf32>
    %77 = vector.shape_cast %76 : vector<8xf32> to vector<8x1xf32>
    %78 = tpu.reciprocal %77 {approx = true} : vector<8x1xf32> -> vector<8x1xf32>
    %79 = vector.broadcast %78 : vector<8x1xf32> to vector<8x8xf32>
    %80 = arith.mulf %75, %79 : vector<8x8xf32>
    %81 = arith.truncf %80 : vector<8x8xf32> to vector<8x8xbf16>
    %cst_23 = arith.constant dense<0.000000e+00> : vector<8x128xf32>
    %82 = tpu.matmul %81, %67, %cst_23 {dimension_numbers = #tpu.dot_dimension_numbers<[1], [0], [0], [1], [0, 0, 1, 1], [], []>} : vector<8x8xbf16>, vector<8x128xbf16>, vector<8x128xf32> -> vector<8x128xf32>
    %83 = arith.truncf %82 : vector<8x128xf32> to vector<8x128xbf16>
    %84 = tpu.concatenate %26, %45, %64, %83 in 1 : vector<8x128xbf16>, vector<8x128xbf16>, vector<8x128xbf16>, vector<8x128xbf16> -> vector<8x512xbf16>
    %c0_24 = arith.constant 0 : index
    %c0_25 = arith.constant 0 : index
    %85 = vector.load %arg3[%c0_24, %c0_25] : memref<512x32xbf16, #tpu.memory_space<vmem>>, vector<512x32xbf16>
    %cst_26 = arith.constant dense<0.000000e+00> : vector<8x32xf32>
    %86 = tpu.matmul %84, %85, %cst_26 {dimension_numbers = #tpu.dot_dimension_numbers<[1], [0], [0], [1], [0, 0, 1, 1], [], []>} : vector<8x512xbf16>, vector<512x32xbf16>, vector<8x32xf32> -> vector<8x32xf32>
    %c0_27 = arith.constant 0 : index
    %c0_28 = arith.constant 0 : index
    %87 = vector.load %arg4[%c0_27, %c0_28] : memref<1x32xf32, #tpu.memory_space<vmem>>, vector<1x32xf32>
    %88 = vector.broadcast %87 : vector<1x32xf32> to vector<8x32xf32>
    %89 = arith.addf %86, %88 : vector<8x32xf32>
    %90 = arith.truncf %89 : vector<8x32xf32> to vector<8x32xbf16>
    %c0_29 = arith.constant 0 : index
    %c0_30 = arith.constant 0 : index
    %c0_31 = arith.constant 0 : index
    %91 = vector.load %arg5[%c0_29, %c0_30, %c0_31] : memref<1x8x32xbf16, #tpu.memory_space<vmem>>, vector<1x8x32xbf16>
    %92 = vector.shape_cast %91 : vector<1x8x32xbf16> to vector<8x32xbf16>
    %93 = vector.shape_cast %90 : vector<8x32xbf16> to vector<1x8x32xbf16>
    tpu.vector_store %arg5[%c0_29, %c0_30, %c0_31], %93 {strides = array<i32>} : memref<1x8x32xbf16, #tpu.memory_space<vmem>>, vector<1x8x32xbf16>,
    return
  }
  func.func @transform_0(%arg0: i32) -> (i32, i32, i32) {
    %c0_i32 = arith.constant 0 : i32
    %c0_i32_0 = arith.constant 0 : i32
    %c0_i32_1 = arith.constant 0 : i32
    return %arg0, %c0_i32, %c0_i32_0 : i32, i32, i32
  }
  func.func @transform_1(%arg0: i32) -> (i32, i32) {
    %c0_i32 = arith.constant 0 : i32
    %c0_i32_0 = arith.constant 0 : i32
    %c0_i32_1 = arith.constant 0 : i32
    return %c0_i32, %c0_i32_0 : i32, i32
  }
  func.func @transform_2(%arg0: i32) -> (i32, i32) {
    %c0_i32 = arith.constant 0 : i32
    %c0_i32_0 = arith.constant 0 : i32
    %c0_i32_1 = arith.constant 0 : i32
    return %c0_i32, %c0_i32_0 : i32, i32
  }
  func.func @transform_3(%arg0: i32) -> (i32, i32) {
    %c0_i32 = arith.constant 0 : i32
    %c0_i32_0 = arith.constant 0 : i32
    %c0_i32_1 = arith.constant 0 : i32
    return %c0_i32, %c0_i32_0 : i32, i32
  }
  func.func @transform_4(%arg0: i32) -> (i32, i32, i32) {
    %c0_i32 = arith.constant 0 : i32
    %c0_i32_0 = arith.constant 0 : i32
    %c0_i32_1 = arith.constant 0 : i32
    return %arg0, %c0_i32, %c0_i32_0 : i32, i32, i32
  }
}

</mosaic_0001>

<llo_original>
// kernel: tpu_custom_call.1
$region0: #{tpu_custom_call.1}
  #allocation0 [shape = 'u32[]', space=smem, size = 0x4, offset = 0x4, fixed_abs, tag = 'smem constant byte address 0x4 - core index']
  #allocation1 [shape = 'u32[144,128]{1,0:T(1,128)}', space=vmem, size = 0x12000, scoped, tag = 'internal scratch']
  %s0 = inlined_call_operand.vmem [shape: bf16[2,8,32], index: 0, kind: input, shape index: {}]
  %s1 = inlined_call_operand.vmem [shape: bf16[32,1536], index: 1, kind: input, shape index: {}]
  %s2 = inlined_call_operand.vmem [shape: bf16[512,32], index: 2, kind: input, shape index: {}]
  %s3 = inlined_call_operand.vmem [shape: f32[1,32], index: 3, kind: input, shape index: {}]
  %s4 = inlined_call_operand.hbm [shape: bf16[2,8,32], index: 4, kind: output, shape index: {}]
  %s5 = sld [smem:[#allocation0]]
  $region49: #{tpu_custom_call.1} parent=0
    _
  %s7 = ssub.s32 1, %s5
  %s8 = scalar_select 0, %s7, %s5
  $region1: #{tpu_custom_call.1} parent=0
    #allocation2 [shape = 'u8[4096]{0}', space=vmem, size = 0x1000, scoped, tag = 'output window, operand 0']
    #allocation3 [shape = 's32[2]{0}', space=sflag, size = 0x8, scoped, tag = 'scoped memory for tpu_custom_call.1']
    %9 = vsyncpa [#allocation3], 0
    %s10 = scalar_lea.sflag [#allocation3], 1
    %11 = vsyncpa %s10, 0
    loop: start=0, step=1, limit=4
    $region2: #{tpu_custom_call.1} parent=1 // loop_pre_header
      _
    $region3: #{tpu_custom_call.1} parent=1 // loop_header
      %s13 = sphi 0, %s17
      %p14 = scmp.ge.s32.totalorder %s13, 4
      %s23 = sphi 0, %s25
      %s26 = sphi 0, %s23
      %s27 = sphi 0, %s26
      %s43 = sphi 0, %s27
      %s47 = sphi 0, %s47
      %s49 = sphi 0, %s47
      %s50 = sphi 0, %s49
      %s64 = sphi 0, %s50
      %s68 = sphi 0, %s68
      %s70 = sphi 0, %s68
      %s71 = sphi 0, %s70
      %s85 = sphi 0, %s71
      %s89 = sphi 0, %s89
      %s91 = sphi 0, %s89
      %s92 = sphi 0, %s91
      %s106 = sphi 0, %s92
      %s112 = sphi 0, %s114
      %s115 = sphi 0, %s112
      %s116 = sphi 0, %s115
      %s132 = sphi 0, %s116
    $region4: #{tpu_custom_call.1} parent=1 // loop_header_branch
      %16 = sbr.rel (%p14) target = $region8
    $region5: #{tpu_custom_call.1} parent=1 // loop_body
      %s18 = ssub.s32 %s13, 1
      %s19 = ssub.s32 %s13, 2
      %s20 = sadd.s32 %s13, 1
      %s21 = ssub.s32 %s13, %s20
      %p22 = scmp.eq.s32.totalorder %s21, 0
      %s24 = sadd.s32 %s23, 1
      %s25 = scalar_select %p22, %s23, %s24
      %p28 = pneg %p22
      %p29 = scmp.eq.s32.totalorder %s13, 1
      %p30 = por %p28, %p29
      %p31 = scmp.ne.s32.totalorder %s23, %s26
      %p32 = scmp.eq.s32.totalorder %s13, 0
      %p33 = por %p31, %p32
      %p34 = scmp.ne.s32.totalorder %s23, %s26
      %p35 = scmp.eq.s32.totalorder %s18, 1
      %p36 = por %p34, %p35
      %p37 = scmp.ne.s32.totalorder %s26, %s27
      %p38 = scmp.eq.s32.totalorder %s18, 0
      %p39 = por %p37, %p38
      %p40 = scmp.ne.s32.totalorder %s26, %s27
      %p41 = scmp.eq.s32.totalorder %s19, 1
      %p42 = por %p40, %p41
      %p44 = scmp.ne.s32.totalorder %s27, %s43
      %p45 = scmp.eq.s32.totalorder %s19, 0
      %p46 = por %p44, %p45
      %s48 = sadd.s32 %s47, 1
      %p51 = scmp.eq.s32.totalorder %s13, 1
      %p52 = scmp.ne.s32.totalorder %s47, %s49
      %p53 = scmp.eq.s32.totalorder %s13, 0
      %p54 = por %p52, %p53
      %p55 = scmp.ne.s32.totalorder %s47, %s49
      %p56 = scmp.eq.s32.totalorder %s18, 1
      %p57 = por %p55, %p56
      %p58 = scmp.ne.s32.totalorder %s49, %s50
      %p59 = scmp.eq.s32.totalorder %s18, 0
      %p60 = por %p58, %p59
      %p61 = scmp.ne.s32.totalorder %s49, %s50
      %p62 = scmp.eq.s32.totalorder %s19, 1
      %p63 = por %p61, %p62
      %p65 = scmp.ne.s32.totalorder %s50, %s64
      %p66 = scmp.eq.s32.totalorder %s19, 0
      %p67 = por %p65, %p66
      %s69 = sadd.s32 %s68, 1
      %p72 = scmp.eq.s32.totalorder %s13, 1
      %p73 = scmp.ne.s32.totalorder %s68, %s70
      %p74 = scmp.eq.s32.totalorder %s13, 0
      %p75 = por %p73, %p74
      %p76 = scmp.ne.s32.totalorder %s68, %s70
      %p77 = scmp.eq.s32.totalorder %s18, 1
      %p78 = por %p76, %p77
      %p79 = scmp.ne.s32.totalorder %s70, %s71
      %p80 = scmp.eq.s32.totalorder %s18, 0
      %p81 = por %p79, %p80
      %p82 = scmp.ne.s32.totalorder %s70, %s71
      %p83 = scmp.eq.s32.totalorder %s19, 1
      %p84 = por %p82, %p83
      %p86 = scmp.ne.s32.totalorder %s71, %s85
      %p87 = scmp.eq.s32.totalorder %s19, 0
      %p88 = por %p86, %p87
      %s90 = sadd.s32 %s89, 1
      %p93 = scmp.eq.s32.totalorder %s13, 1
      %p94 = scmp.ne.s32.totalorder %s89, %s91
      %p95 = scmp.eq.s32.totalorder %s13, 0
      %p96 = por %p94, %p95
      %p97 = scmp.ne.s32.totalorder %s89, %s91
      %p98 = scmp.eq.s32.totalorder %s18, 1
      %p99 = por %p97, %p98
      %p100 = scmp.ne.s32.totalorder %s91, %s92
      %p101 = scmp.eq.s32.totalorder %s18, 0
      %p102 = por %p100, %p101
      %p103 = scmp.ne.s32.totalorder %s91, %s92
      %p104 = scmp.eq.s32.totalorder %s19, 1
      %p105 = por %p103, %p104
      %p107 = scmp.ne.s32.totalorder %s92, %s106
      %p108 = scmp.eq.s32.totalorder %s19, 0
      %p109 = por %p107, %p108
      %s110 = ssub.s32 %s13, %s20
      %p111 = scmp.eq.s32.totalorder %s110, 0
      %s113 = sadd.s32 %s112, 1
      %s114 = scalar_select %p111, %s112, %s113
      %p117 = pneg %p111
      %p118 = scmp.eq.s32.totalorder %s13, 1
      %p119 = por %p117, %p118
      %p120 = scmp.ne.s32.totalorder %s112, %s115
      %p121 = scmp.eq.s32.totalorder %s13, 0
      %p122 = por %p120, %p121
      %p123 = scmp.ne.s32.totalorder %s112, %s115
      %p124 = scmp.eq.s32.totalorder %s18, 1
      %p125 = por %p123, %p124
      %p126 = scmp.ne.s32.totalorder %s115, %s116
      %p127 = scmp.eq.s32.totalorder %s18, 0
      %p128 = por %p126, %p127
      %p129 = scmp.ne.s32.totalorder %s115, %s116
      %p130 = scmp.eq.s32.totalorder %s19, 1
      %p131 = por %p129, %p130
      %p133 = scmp.ne.s32.totalorder %s116, %s132
      %p134 = scmp.eq.s32.totalorder %s19, 0
      %p135 = por %p133, %p134
      %p136 = scmp.le.s32.totalorder 1, %s13
      %p137 = scmp.lt.s32.totalorder %s13, 3
      %p138 = pnand %p136, %p137
      %p139 = pneg %p138
      // Predicated region
      $region9: #{tpu_custom_call.1} parent=5 // pred_check
        _
      $region10: #{tpu_custom_call.1} parent=5 // pred_check_branch
        %141 = sbr.rel (%p138) target = $region12
      $region11: #{tpu_custom_call.1} parent=5 // pred_region
        %s142 = ssub.s32 %s13, 1
        // Predicated region
        $region13: #{tpu_custom_call.1} parent=11 // pred_check
          %p143 = pneg %p60
        $region14: #{tpu_custom_call.1} parent=11 // pred_check_branch
          %145 = sbr.rel (%p143) target = $region16
        $region15: #{tpu_custom_call.1} parent=11 // pred_region
          _
        $region16: #{tpu_custom_call.1} parent=11 // pred_fallthru
          _
        // Predicated region
        $region17: #{tpu_custom_call.1} parent=11 // pred_check
          %p146 = pneg %p81
        $region18: #{tpu_custom_call.1} parent=11 // pred_check_branch
          %148 = sbr.rel (%p146) target = $region20
        $region19: #{tpu_custom_call.1} parent=11 // pred_region
          _
        $region20: #{tpu_custom_call.1} parent=11 // pred_fallthru
          _
        // Predicated region
        $region21: #{tpu_custom_call.1} parent=11 // pred_check
          %p149 = pneg %p102
        $region22: #{tpu_custom_call.1} parent=11 // pred_check_branch
          %151 = sbr.rel (%p149) target = $region24
        $region23: #{tpu_custom_call.1} parent=11 // pred_region
          _
        $region24: #{tpu_custom_call.1} parent=11 // pred_fallthru
          _
      $region12: #{tpu_custom_call.1} parent=5 // pred_fallthru
        _
      %p152 = scmp.lt.s32.totalorder %s13, 2
      // Predicated region
      $region25: #{tpu_custom_call.1} parent=5 // pred_check
        %p153 = pneg %p152
      $region26: #{tpu_custom_call.1} parent=5 // pred_check_branch
        %155 = sbr.rel (%p153) target = $region28
      $region27: #{tpu_custom_call.1} parent=5 // pred_region
        // Predicated region
        $region29: #{tpu_custom_call.1} parent=27 // pred_check
          %p156 = pneg %p33
        $region30: #{tpu_custom_call.1} parent=27 // pred_check_branch
          %158 = sbr.rel (%p156) target = $region32
        $region31: #{tpu_custom_call.1} parent=27 // pred_region
          %p159 = scmp.lt.s32.totalorder %s13, 1
          %s160 = scalar_select %p159, %s13, 1
          %s161 = smul.addr %s160, 4
          %s162 = scalar_lea.vmem %s0, %s161
        $region32: #{tpu_custom_call.1} parent=27 // pred_fallthru
          _
      $region28: #{tpu_custom_call.1} parent=5 // pred_fallthru
        _
      %p163 = scmp.le.s32.totalorder 1, %s13
      %p164 = scmp.lt.s32.totalorder %s13, 3
      %p165 = pnand %p163, %p164
      %p166 = pneg %p165
      // Predicated region
      $region33: #{tpu_custom_call.1} parent=5 // pred_check
        _
      $region34: #{tpu_custom_call.1} parent=5 // pred_check_branch
        %168 = sbr.rel (%p165) target = $region36
      $region35: #{tpu_custom_call.1} parent=5 // pred_region
        %s169 = ssub.s32 %s13, 1
        %p170 = scmp.lt.s32.totalorder %s18, 1
        %s171 = scalar_select %p170, %s18, 1
        %s172 = smul.addr %s171, 4
        %s173 = scalar_lea.vmem %s0, %s172
        %p174 = pneg %p39
        %p175 = pneg %p36
        %p176 = pneg %p60
        %p177 = pneg %p57
        %p178 = pneg %p81
        %p179 = pneg %p78
        %p180 = pneg %p102
        %p181 = pneg %p99
        %p182 = pneg %p128
        %p183 = pneg %p125
        %s184 = sand.u32 %s115, 1
        %s185 = scalar_lea.sflag [#allocation3], %s184
        %s186 = sand.u32 %s115, 1
        %s187 = smul.addr %s186, 4
        %s188 = scalar_lea.vmem [#allocation2], %s187
        %p189 = scmp.lt.s32.totalorder %s18, 1
        %s190 = scalar_select %p189, %s18, 1
        %s191 = smul.addr %s190, 4
        %s192 = scalar_lea.vmem %s0, %s191
        %v194 = vld [vmem:[%s192] sm:$0xf]
        %v195 = vld [vmem:[%s1] sm:$0xff]
        %v196 = vld [vmem:[%s1 + $0x8] sm:$0xff]
        %v197 = vld [vmem:[%s1 + $0x10] sm:$0xff]
        %v198 = vld [vmem:[%s1 + $0x18] sm:$0xff]
        %v199 = vld [vmem:[%s1 + $0x20] sm:$0xff]
        %v200 = vld [vmem:[%s1 + $0x28] sm:$0xff]
        %v201 = vld [vmem:[%s1 + $0x30] sm:$0xff]
        %v202 = vld [vmem:[%s1 + $0x38] sm:$0xff]
        %v203 = vld [vmem:[%s1 + $0x40] sm:$0xff]
        %v204 = vld [vmem:[%s1 + $0x48] sm:$0xff]
        %v205 = vld [vmem:[%s1 + $0x50] sm:$0xff]
        %v206 = vld [vmem:[%s1 + $0x58] sm:$0xff]
        %v207 = vld [vmem:[%s1 + $0x60] sm:$0xff]
        %v208 = vld [vmem:[%s1 + $0x68] sm:$0xff]
        %v209 = vld [vmem:[%s1 + $0x70] sm:$0xff]
        %v210 = vld [vmem:[%s1 + $0x78] sm:$0xff]
        %v211 = vld [vmem:[%s1 + $0x80] sm:$0xff]
        %v212 = vld [vmem:[%s1 + $0x88] sm:$0xff]
        %v213 = vld [vmem:[%s1 + $0x90] sm:$0xff]
        %v214 = vld [vmem:[%s1 + $0x98] sm:$0xff]
        %v215 = vld [vmem:[%s1 + $0xa0] sm:$0xff]
        %v216 = vld [vmem:[%s1 + $0xa8] sm:$0xff]
        %v217 = vld [vmem:[%s1 + $0xb0] sm:$0xff]
        %v218 = vld [vmem:[%s1 + $0xb8] sm:$0xff]
        %v243 = vunpack.c.l.b16 %v195
        %v244 = vunpack.c.h.b16 %v195
        %v245 = vunpack.c.l.b16 %v196
        %v246 = vunpack.c.h.b16 %v196
        %v247 = vunpack.c.l.b16 %v197
        %v248 = vunpack.c.h.b16 %v197
        %v249 = vunpack.c.l.b16 %v198
        %v250 = vunpack.c.h.b16 %v198
        %v251 = vunpack.c.l.b16 %v199
        %v252 = vunpack.c.h.b16 %v199
        %v253 = vunpack.c.l.b16 %v200
        %v254 = vunpack.c.h.b16 %v200
        %v255 = vunpack.c.l.b16 %v201
        %v256 = vunpack.c.h.b16 %v201
        %v257 = vunpack.c.l.b16 %v202
        %v258 = vunpack.c.h.b16 %v202
        %v259 = vunpack.c.l.b16 %v203
        %v260 = vunpack.c.h.b16 %v203
        %v261 = vunpack.c.l.b16 %v204
        %v262 = vunpack.c.h.b16 %v204
        %v263 = vunpack.c.l.b16 %v205
        %v264 = vunpack.c.h.b16 %v205
        %v265 = vunpack.c.l.b16 %v206
        %v266 = vunpack.c.h.b16 %v206
        %v267 = vunpack.c.l.b16 %v207
        %v268 = vunpack.c.h.b16 %v207
        %v269 = vunpack.c.l.b16 %v208
        %v270 = vunpack.c.h.b16 %v208
        %v271 = vunpack.c.l.b16 %v209
        %v272 = vunpack.c.h.b16 %v209
        %v273 = vunpack.c.l.b16 %v210
        %v274 = vunpack.c.h.b16 %v210
        %v275 = vunpack.c.l.b16 %v211
        %v276 = vunpack.c.h.b16 %v211
        %v277 = vunpack.c.l.b16 %v212
        %v278 = vunpack.c.h.b16 %v212
        %v279 = vunpack.c.l.b16 %v213
        %v280 = vunpack.c.h.b16 %v213
        %v281 = vunpack.c.l.b16 %v214
        %v282 = vunpack.c.h.b16 %v214
        %v283 = vunpack.c.l.b16 %v215
        %v284 = vunpack.c.h.b16 %v215
        %v285 = vunpack.c.l.b16 %v216
        %v286 = vunpack.c.h.b16 %v216
        %v287 = vunpack.c.l.b16 %v217
        %v288 = vunpack.c.h.b16 %v217
        %v289 = vunpack.c.l.b16 %v218
        %v290 = vunpack.c.h.b16 %v218
        %v291 = vpack.c.b16 %v255, %v243
        %v292 = vpack.c.b16 %v256, %v244
        %v293 = vpack.c.b16 %v257, %v245
        %v294 = vpack.c.b16 %v258, %v246
        %v295 = vpack.c.b16 %v259, %v247
        %v296 = vpack.c.b16 %v260, %v248
        %v297 = vpack.c.b16 %v261, %v249
        %v298 = vpack.c.b16 %v262, %v250
        %v299 = vpack.c.b16 %v263, %v251
        %v300 = vpack.c.b16 %v264, %v252
        %v301 = vpack.c.b16 %v265, %v253
        %v302 = vpack.c.b16 %v266, %v254
        %v303 = vpack.c.b16 %v279, %v267
        %v304 = vpack.c.b16 %v280, %v268
        %v305 = vpack.c.b16 %v281, %v269
        %v306 = vpack.c.b16 %v282, %v270
        %v307 = vpack.c.b16 %v283, %v271
        %v308 = vpack.c.b16 %v284, %v272
        %v309 = vpack.c.b16 %v285, %v273
        %v310 = vpack.c.b16 %v286, %v274
        %v311 = vpack.c.b16 %v287, %v275
        %v312 = vpack.c.b16 %v288, %v276
        %v313 = vpack.c.b16 %v289, %v277
        %v314 = vpack.c.b16 %v290, %v278
        %vm339 = vcmask 261120
        %v341 = vsel %vm339, %v194, 0
        %343 = vmatprep.subr.bf16.mxu0 %v292
        %344 = vmatpush1.bf16.msra.mxu0 %v291
        %345 = vmatprep.subr.bf16.mxu0 %v304
        %346 = vmatpush1.bf16.msra.mxu0 %v303
        %347 = vmatprep.subr.bf16.mxu0 0
        %348 = vmatpush1.bf16.msra.mxu0 0
        %349 = vmatprep.subr.bf16.mxu0 0
        %350 = vmatpush1.bf16.msra.mxu0 0
        %351 = vmatprep.subr.bf16.mxu0 0
        %352 = vmatpush1.bf16.msra.mxu0 0
        %353 = vmatprep.subr.bf16.mxu0 0
        %354 = vmatpush1.bf16.msra.mxu0 0
        %355 = vmatprep.subr.bf16.mxu0 0
        %356 = vmatpush1.bf16.msra.mxu0 0
        %357 = vmatprep.subr.bf16.mxu0 0
        %358 = vmatpush1.bf16.msra.mxu0 0
        %359 = vmatprep.subr.bf16.mxu0 0
        %360 = vmatpush1.bf16.msra.mxu0 0
        %361 = vmatprep.subr.bf16.mxu0 0
        %362 = vmatpush1.bf16.msra.mxu0 0
        %363 = vmatprep.subr.bf16.mxu0 0
        %364 = vmatpush1.bf16.msra.mxu0 0
        %365 = vmatprep.subr.bf16.mxu0 0
        %366 = vmatpush1.bf16.msra.mxu0 0
        %367 = vmatprep.subr.bf16.mxu0 0
        %368 = vmatpush1.bf16.msra.mxu0 0
        %369 = vmatprep.subr.bf16.mxu0 0
        %370 = vmatpush1.bf16.msra.mxu0 0
        %371 = vmatprep.subr.bf16.mxu0 0
        %372 = vmatpush1.bf16.msra.mxu0 0
        %373 = vmatprep.subr.bf16.mxu0 0
        %374 = vmatpush1.bf16.msra.mxu0 0
        %375 = vmatprep.mubr.bf16.mxu0 0
        %376 = vmatmul.mubr.bf16.gmra.mrb[0].mxu0 %v341
        %v377 = vpop.f32.mrb[0].mxu0
        %v378 = vadd.f32 0.0, %v377
        %v379 = vpop.f32.mrb[0].mxu0
        %v380 = vadd.f32 0.0, %v379
        %v381 = vpop.f32.mrb[0].mxu0
        %v382 = vpop.f32.mrb[0].mxu0
        %383 = vdwg.mxu0
        %384 = vmatprep.subr.bf16.mxu0 %v294
        %385 = vmatpush1.bf16.msra.mxu0 %v293
        %386 = vmatprep.subr.bf16.mxu0 %v306
        %387 = vmatpush1.bf16.msra.mxu0 %v305
        %388 = vmatprep.subr.bf16.mxu0 0
        %389 = vmatpush1.bf16.msra.mxu0 0
        %390 = vmatprep.subr.bf16.mxu0 0
        %391 = vmatpush1.bf16.msra.mxu0 0
        %392 = vmatprep.subr.bf16.mxu0 0
        %393 = vmatpush1.bf16.msra.mxu0 0
        %394 = vmatprep.subr.bf16.mxu0 0
        %395 = vmatpush1.bf16.msra.mxu0 0
        %396 = vmatprep.subr.bf16.mxu0 0
        %397 = vmatpush1.bf16.msra.mxu0 0
        %398 = vmatprep.subr.bf16.mxu0 0
        %399 = vmatpush1.bf16.msra.mxu0 0
        %400 = vmatprep.subr.bf16.mxu0 0
        %401 = vmatpush1.bf16.msra.mxu0 0
        %402 = vmatprep.subr.bf16.mxu0 0
        %403 = vmatpush1.bf16.msra.mxu0 0
        %404 = vmatprep.subr.bf16.mxu0 0
        %405 = vmatpush1.bf16.msra.mxu0 0
        %406 = vmatprep.subr.bf16.mxu0 0
        %407 = vmatpush1.bf16.msra.mxu0 0
        %408 = vmatprep.subr.bf16.mxu0 0
        %409 = vmatpush1.bf16.msra.mxu0 0
        %410 = vmatprep.subr.bf16.mxu0 0
        %411 = vmatpush1.bf16.msra.mxu0 0
        %412 = vmatprep.subr.bf16.mxu0 0
        %413 = vmatpush1.bf16.msra.mxu0 0
        %414 = vmatprep.subr.bf16.mxu0 0
        %415 = vmatpush1.bf16.msra.mxu0 0
        %416 = vmatprep.mubr.bf16.mxu0 0
        %417 = vmatmul.mubr.bf16.gmra.mrb[0].mxu0 %v341
        %v418 = vpop.f32.mrb[0].mxu0
        %v419 = vadd.f32 0.0, %v418
        %v420 = vpop.f32.mrb[0].mxu0
        %v421 = vadd.f32 0.0, %v420
        %v422 = vpop.f32.mrb[0].mxu0
        %v423 = vpop.f32.mrb[0].mxu0
        %424 = vdwg.mxu0
        %425 = vmatprep.subr.bf16.mxu0 %v296
        %426 = vmatpush1.bf16.msra.mxu0 %v295
        %427 = vmatprep.subr.bf16.mxu0 %v308
        %428 = vmatpush1.bf16.msra.mxu0 %v307
        %429 = vmatprep.subr.bf16.mxu0 0
        %430 = vmatpush1.bf16.msra.mxu0 0
        %431 = vmatprep.subr.bf16.mxu0 0
        %432 = vmatpush1.bf16.msra.mxu0 0
        %433 = vmatprep.subr.bf16.mxu0 0
        %434 = vmatpush1.bf16.msra.mxu0 0
        %435 = vmatprep.subr.bf16.mxu0 0
        %436 = vmatpush1.bf16.msra.mxu0 0
        %437 = vmatprep.subr.bf16.mxu0 0
        %438 = vmatpush1.bf16.msra.mxu0 0
        %439 = vmatprep.subr.bf16.mxu0 0
        %440 = vmatpush1.bf16.msra.mxu0 0
        %441 = vmatprep.subr.bf16.mxu0 0
        %442 = vmatpush1.bf16.msra.mxu0 0
        %443 = vmatprep.subr.bf16.mxu0 0
        %444 = vmatpush1.bf16.msra.mxu0 0
        %445 = vmatprep.subr.bf16.mxu0 0
        %446 = vmatpush1.bf16.msra.mxu0 0
        %447 = vmatprep.subr.bf16.mxu0 0
        %448 = vmatpush1.bf16.msra.mxu0 0
        %449 = vmatprep.subr.bf16.mxu0 0
        %450 = vmatpush1.bf16.msra.mxu0 0
        %451 = vmatprep.subr.bf16.mxu0 0
        %452 = vmatpush1.bf16.msra.mxu0 0
        %453 = vmatprep.subr.bf16.mxu0 0
        %454 = vmatpush1.bf16.msra.mxu0 0
        %455 = vmatprep.subr.bf16.mxu0 0
        %456 = vmatpush1.bf16.msra.mxu0 0
        %457 = vmatprep.mubr.bf16.mxu0 0
        %458 = vmatmul.mubr.bf16.gmra.mrb[0].mxu0 %v341
        %v459 = vpop.f32.mrb[0].mxu0
        %v460 = vadd.f32 0.0, %v459
        %v461 = vpop.f32.mrb[0].mxu0
        %v462 = vadd.f32 0.0, %v461
        %v463 = vpop.f32.mrb[0].mxu0
        %v464 = vpop.f32.mrb[0].mxu0
        %465 = vdwg.mxu0
        %466 = vmatprep.subr.bf16.mxu0 %v298
        %467 = vmatpush1.bf16.msra.mxu0 %v297
        %468 = vmatprep.subr.bf16.mxu0 %v310
        %469 = vmatpush1.bf16.msra.mxu0 %v309
        %470 = vmatprep.subr.bf16.mxu0 0
        %471 = vmatpush1.bf16.msra.mxu0 0
        %472 = vmatprep.subr.bf16.mxu0 0
        %473 = vmatpush1.bf16.msra.mxu0 0
        %474 = vmatprep.subr.bf16.mxu0 0
        %475 = vmatpush1.bf16.msra.mxu0 0
        %476 = vmatprep.subr.bf16.mxu0 0
        %477 = vmatpush1.bf16.msra.mxu0 0
        %478 = vmatprep.subr.bf16.mxu0 0
        %479 = vmatpush1.bf16.msra.mxu0 0
        %480 = vmatprep.subr.bf16.mxu0 0
        %481 = vmatpush1.bf16.msra.mxu0 0
        %482 = vmatprep.subr.bf16.mxu0 0
        %483 = vmatpush1.bf16.msra.mxu0 0
        %484 = vmatprep.subr.bf16.mxu0 0
        %485 = vmatpush1.bf16.msra.mxu0 0
        %486 = vmatprep.subr.bf16.mxu0 0
        %487 = vmatpush1.bf16.msra.mxu0 0
        %488 = vmatprep.subr.bf16.mxu0 0
        %489 = vmatpush1.bf16.msra.mxu0 0
        %490 = vmatprep.subr.bf16.mxu0 0
        %491 = vmatpush1.bf16.msra.mxu0 0
        %492 = vmatprep.subr.bf16.mxu0 0
        %493 = vmatpush1.bf16.msra.mxu0 0
        %494 = vmatprep.subr.bf16.mxu0 0
        %495 = vmatpush1.bf16.msra.mxu0 0
        %496 = vmatprep.subr.bf16.mxu0 0
        %497 = vmatpush1.bf16.msra.mxu0 0
        %498 = vmatprep.mubr.bf16.mxu0 0
        %499 = vmatmul.mubr.bf16.gmra.mrb[0].mxu0 %v341
        %v500 = vpop.f32.mrb[0].mxu0
        %v501 = vadd.f32 0.0, %v500
        %v502 = vpop.f32.mrb[0].mxu0
        %v503 = vadd.f32 0.0, %v502
        %v504 = vpop.f32.mrb[0].mxu0
        %v505 = vpop.f32.mrb[0].mxu0
        %506 = vdwg.mxu0
        %507 = vmatprep.subr.bf16.mxu0 %v300
        %508 = vmatpush1.bf16.msra.mxu0 %v299
        %509 = vmatprep.subr.bf16.mxu0 %v312
        %510 = vmatpush1.bf16.msra.mxu0 %v311
        %511 = vmatprep.subr.bf16.mxu0 0
        %512 = vmatpush1.bf16.msra.mxu0 0
        %513 = vmatprep.subr.bf16.mxu0 0
        %514 = vmatpush1.bf16.msra.mxu0 0
        %515 = vmatprep.subr.bf16.mxu0 0
        %516 = vmatpush1.bf16.msra.mxu0 0
        %517 = vmatprep.subr.bf16.mxu0 0
        %518 = vmatpush1.bf16.msra.mxu0 0
        %519 = vmatprep.subr.bf16.mxu0 0
        %520 = vmatpush1.bf16.msra.mxu0 0
        %521 = vmatprep.subr.bf16.mxu0 0
        %522 = vmatpush1.bf16.msra.mxu0 0
        %523 = vmatprep.subr.bf16.mxu0 0
        %524 = vmatpush1.bf16.msra.mxu0 0
        %525 = vmatprep.subr.bf16.mxu0 0
        %526 = vmatpush1.bf16.msra.mxu0 0
        %527 = vmatprep.subr.bf16.mxu0 0
        %528 = vmatpush1.bf16.msra.mxu0 0
        %529 = vmatprep.subr.bf16.mxu0 0
        %530 = vmatpush1.bf16.msra.mxu0 0
        %531 = vmatprep.subr.bf16.mxu0 0
        %532 = vmatpush1.bf16.msra.mxu0 0
        %533 = vmatprep.subr.bf16.mxu0 0
        %534 = vmatpush1.bf16.msra.mxu0 0
        %535 = vmatprep.subr.bf16.mxu0 0
        %536 = vmatpush1.bf16.msra.mxu0 0
        %537 = vmatprep.subr.bf16.mxu0 0
        %538 = vmatpush1.bf16.msra.mxu0 0
        %539 = vmatprep.mubr.bf16.mxu0 0
        %540 = vmatmul.mubr.bf16.gmra.mrb[0].mxu0 %v341
        %v541 = vpop.f32.mrb[0].mxu0
        %v542 = vadd.f32 0.0, %v541
        %v543 = vpop.f32.mrb[0].mxu0
        %v544 = vadd.f32 0.0, %v543
        %v545 = vpop.f32.mrb[0].mxu0
        %v546 = vpop.f32.mrb[0].mxu0
        %547 = vdwg.mxu0
        %548 = vmatprep.subr.bf16.mxu0 %v302
        %549 = vmatpush1.bf16.msra.mxu0 %v301
        %550 = vmatprep.subr.bf16.mxu0 %v314
        %551 = vmatpush1.bf16.msra.mxu0 %v313
        %552 = vmatprep.subr.bf16.mxu0 0
        %553 = vmatpush1.bf16.msra.mxu0 0
        %554 = vmatprep.subr.bf16.mxu0 0
        %555 = vmatpush1.bf16.msra.mxu0 0
        %556 = vmatprep.subr.bf16.mxu0 0
        %557 = vmatpush1.bf16.msra.mxu0 0
        %558 = vmatprep.subr.bf16.mxu0 0
        %559 = vmatpush1.bf16.msra.mxu0 0
        %560 = vmatprep.subr.bf16.mxu0 0
        %561 = vmatpush1.bf16.msra.mxu0 0
        %562 = vmatprep.subr.bf16.mxu0 0
        %563 = vmatpush1.bf16.msra.mxu0 0
        %564 = vmatprep.subr.bf16.mxu0 0
        %565 = vmatpush1.bf16.msra.mxu0 0
        %566 = vmatprep.subr.bf16.mxu0 0
        %567 = vmatpush1.bf16.msra.mxu0 0
        %568 = vmatprep.subr.bf16.mxu0 0
        %569 = vmatpush1.bf16.msra.mxu0 0
        %570 = vmatprep.subr.bf16.mxu0 0
        %571 = vmatpush1.bf16.msra.mxu0 0
        %572 = vmatprep.subr.bf16.mxu0 0
        %573 = vmatpush1.bf16.msra.mxu0 0
        %574 = vmatprep.subr.bf16.mxu0 0
        %575 = vmatpush1.bf16.msra.mxu0 0
        %576 = vmatprep.subr.bf16.mxu0 0
        %577 = vmatpush1.bf16.msra.mxu0 0
        %578 = vmatprep.subr.bf16.mxu0 0
        %579 = vmatpush1.bf16.msra.mxu0 0
        %580 = vmatprep.mubr.bf16.mxu0 0
        %581 = vmatmul.mubr.bf16.gmra.mrb[0].mxu0 %v341
        %v582 = vpop.f32.mrb[0].mxu0
        %v583 = vadd.f32 0.0, %v582
        %v584 = vpop.f32.mrb[0].mxu0
        %v585 = vadd.f32 0.0, %v584
        %v586 = vpop.f32.mrb[0].mxu0
        %v587 = vpop.f32.mrb[0].mxu0
        %588 = vdwg.mxu0
        %v589 = vpack.c.bf16 %v378, %v378
        %v590 = vpack.c.bf16 %v380, %v380
        %v591 = vpack.c.bf16 %v419, %v419
        %v592 = vpack.c.bf16 %v421, %v421
        %v593 = vpack.c.bf16 %v460, %v460
        %v594 = vpack.c.bf16 %v462, %v462
        %v595 = vpack.c.bf16 %v501, %v501
        %v596 = vpack.c.bf16 %v503, %v503
        %v597 = vpack.c.bf16 %v542, %v542
        %v598 = vpack.c.bf16 %v544, %v544
        %v599 = vpack.c.bf16 %v583, %v583
        %v600 = vpack.c.bf16 %v585, %v585
        %v601 = vlaneseq
        %v602 = vshrl.u32 %v601, 7
        %v603 = vlaneseq
        %v604 = vand.u32 %v603, 127
        %vm605 = vcmp.le.s32.totalorder %v604, %v602
        %606 = vmatprep.subr.bf16.mxu0 0
        %607 = vmatpush1.bf16.xpose.msra.mxu0 %v593
        %608 = vmatprep.subr.bf16.mxu0 0
        %609 = vmatpush1.bf16.xpose.msra.mxu0 0
        %610 = vmatprep.subr.bf16.mxu0 0
        %611 = vmatpush1.bf16.xpose.msra.mxu0 0
        %612 = vmatprep.subr.bf16.mxu0 0
        %613 = vmatpush1.bf16.xpose.msra.mxu0 0
        %614 = vmatprep.subr.bf16.mxu0 0
        %615 = vmatpush1.bf16.xpose.msra.mxu0 0
        %616 = vmatprep.subr.bf16.mxu0 0
        %617 = vmatpush1.bf16.xpose.msra.mxu0 0
        %618 = vmatprep.subr.bf16.mxu0 0
        %619 = vmatpush1.bf16.xpose.msra.mxu0 0
        %620 = vmatprep.subr.bf16.mxu0 0
        %621 = vmatpush1.bf16.xpose.msra.mxu0 0
        %622 = vmatprep.subr.bf16.mxu0 0
        %623 = vmatpush1.bf16.xpose.msra.mxu0 0
        %624 = vmatprep.subr.bf16.mxu0 0
        %625 = vmatpush1.bf16.xpose.msra.mxu0 0
        %626 = vmatprep.subr.bf16.mxu0 0
        %627 = vmatpush1.bf16.xpose.msra.mxu0 0
        %628 = vmatprep.subr.bf16.mxu0 0
        %629 = vmatpush1.bf16.xpose.msra.mxu0 0
        %630 = vmatprep.subr.bf16.mxu0 0
        %631 = vmatpush1.bf16.xpose.msra.mxu0 0
        %632 = vmatprep.subr.bf16.mxu0 0
        %633 = vmatpush1.bf16.xpose.msra.mxu0 0
        %634 = vmatprep.subr.bf16.mxu0 0
        %635 = vmatpush1.bf16.xpose.msra.mxu0 0
        %636 = vmatprep.subr.bf16.mxu0 0
        %637 = vmatpush1.bf16.xpose.msra.mxu0 0
        %638 = vmatprep.mubr.bf16.mxu0 0
        %639 = vmatmul.mubr.bf16.gmra.mrb[0].mxu0 %v589
        %v640 = vpop.f32.mrb[0].mxu0
        %v641 = vadd.f32 0.0, %v640
        %v642 = vpop.f32.mrb[0].mxu0
        %v643 = vpop.f32.mrb[0].mxu0
        %v644 = vpop.f32.mrb[0].mxu0
        %645 = vdwg.mxu0
        %v646 = vsel %vm605, %v641, -1e+30
        %vm647 = vcmask 64512
        %v648 = vsel %vm647, %v646, -inf
        %649 = vmax.xlane.f32.xlu0 %v648
        %v650 = vpop.xlane.xlu0 %649
        %v651 = vsub.f32 %v646, %v650
        %v652 = vmul.f32 %v651, 1.442695
        %v653 = vpow.pop %v652
        %v654 = vsel %vm647, %v653, 0.0
        %655 = vadd.xlane.f32.xlu0 %v654
        %v656 = vpop.xlane.xlu0 %655
        %v657 = vrcp.pop %v656
        %v658 = vmul.f32 %v653, %v657
        %v659 = vpack.c.bf16 %v658, %v658
        %v661 = vsel %vm647, %v659, 0
        %vm663 = vcmask 1043456
        %v665 = vsel %vm663, %v597, 0
        %667 = vmatprep.subr.bf16.mxu0 0
        %668 = vmatpush1.bf16.msra.mxu0 %v665
        %669 = vmatprep.subr.bf16.mxu0 0
        %670 = vmatpush1.bf16.msra.mxu0 0
        %671 = vmatprep.subr.bf16.mxu0 0
        %672 = vmatpush1.bf16.msra.mxu0 0
        %673 = vmatprep.subr.bf16.mxu0 0
        %674 = vmatpush1.bf16.msra.mxu0 0
        %675 = vmatprep.subr.bf16.mxu0 0
        %676 = vmatpush1.bf16.msra.mxu0 0
        %677 = vmatprep.subr.bf16.mxu0 0
        %678 = vmatpush1.bf16.msra.mxu0 0
        %679 = vmatprep.subr.bf16.mxu0 0
        %680 = vmatpush1.bf16.msra.mxu0 0
        %681 = vmatprep.subr.bf16.mxu0 0
        %682 = vmatpush1.bf16.msra.mxu0 0
        %683 = vmatprep.subr.bf16.mxu0 0
        %684 = vmatpush1.bf16.msra.mxu0 0
        %685 = vmatprep.subr.bf16.mxu0 0
        %686 = vmatpush1.bf16.msra.mxu0 0
        %687 = vmatprep.subr.bf16.mxu0 0
        %688 = vmatpush1.bf16.msra.mxu0 0
        %689 = vmatprep.subr.bf16.mxu0 0
        %690 = vmatpush1.bf16.msra.mxu0 0
        %691 = vmatprep.subr.bf16.mxu0 0
        %692 = vmatpush1.bf16.msra.mxu0 0
        %693 = vmatprep.subr.bf16.mxu0 0
        %694 = vmatpush1.bf16.msra.mxu0 0
        %695 = vmatprep.subr.bf16.mxu0 0
        %696 = vmatpush1.bf16.msra.mxu0 0
        %697 = vmatprep.subr.bf16.mxu0 0
        %698 = vmatpush1.bf16.msra.mxu0 0
        %699 = vmatprep.mubr.bf16.mxu0 0
        %700 = vmatmul.mubr.bf16.gmra.mrb[0].mxu0 %v661
        %v701 = vpop.f32.mrb[0].mxu0
        %v702 = vadd.f32 0.0, %v701
        %v703 = vpop.f32.mrb[0].mxu0
        %v704 = vpop.f32.mrb[0].mxu0
        %v705 = vpop.f32.mrb[0].mxu0
        %706 = vdwg.mxu0
        %v707 = vpack.c.bf16 %v702, %v702
        %708 = vmatprep.subr.bf16.mxu0 0
        %709 = vmatpush1.bf16.xpose.msra.mxu0 %v594
        %710 = vmatprep.subr.bf16.mxu0 0
        %711 = vmatpush1.bf16.xpose.msra.mxu0 0
        %712 = vmatprep.subr.bf16.mxu0 0
        %713 = vmatpush1.bf16.xpose.msra.mxu0 0
        %714 = vmatprep.subr.bf16.mxu0 0
        %715 = vmatpush1.bf16.xpose.msra.mxu0 0
        %716 = vmatprep.subr.bf16.mxu0 0
        %717 = vmatpush1.bf16.xpose.msra.mxu0 0
        %718 = vmatprep.subr.bf16.mxu0 0
        %719 = vmatpush1.bf16.xpose.msra.mxu0 0
        %720 = vmatprep.subr.bf16.mxu0 0
        %721 = vmatpush1.bf16.xpose.msra.mxu0 0
        %722 = vmatprep.subr.bf16.mxu0 0
        %723 = vmatpush1.bf16.xpose.msra.mxu0 0
        %724 = vmatprep.subr.bf16.mxu0 0
        %725 = vmatpush1.bf16.xpose.msra.mxu0 0
        %726 = vmatprep.subr.bf16.mxu0 0
        %727 = vmatpush1.bf16.xpose.msra.mxu0 0
        %728 = vmatprep.subr.bf16.mxu0 0
        %729 = vmatpush1.bf16.xpose.msra.mxu0 0
        %730 = vmatprep.subr.bf16.mxu0 0
        %731 = vmatpush1.bf16.xpose.msra.mxu0 0
        %732 = vmatprep.subr.bf16.mxu0 0
        %733 = vmatpush1.bf16.xpose.msra.mxu0 0
        %734 = vmatprep.subr.bf16.mxu0 0
        %735 = vmatpush1.bf16.xpose.msra.mxu0 0
        %736 = vmatprep.subr.bf16.mxu0 0
        %737 = vmatpush1.bf16.xpose.msra.mxu0 0
        %738 = vmatprep.subr.bf16.mxu0 0
        %739 = vmatpush1.bf16.xpose.msra.mxu0 0
        %740 = vmatprep.mubr.bf16.mxu0 0
        %741 = vmatmul.mubr.bf16.gmra.mrb[0].mxu0 %v590
        %v742 = vpop.f32.mrb[0].mxu0
        %v743 = vadd.f32 0.0, %v742
        %v744 = vpop.f32.mrb[0].mxu0
        %v745 = vpop.f32.mrb[0].mxu0
        %v746 = vpop.f32.mrb[0].mxu0
        %747 = vdwg.mxu0
        %v748 = vsel %vm605, %v743, -1e+30
        %v749 = vsel %vm647, %v748, -inf
        %750 = vmax.xlane.f32.xlu0 %v749
        %v751 = vpop.xlane.xlu0 %750
        %v752 = vsub.f32 %v748, %v751
        %v753 = vmul.f32 %v752, 1.442695
        %v754 = vpow.pop %v753
        %v755 = vsel %vm647, %v754, 0.0
        %756 = vadd.xlane.f32.xlu0 %v755
        %v757 = vpop.xlane.xlu0 %756
        %v758 = vrcp.pop %v757
        %v759 = vmul.f32 %v754, %v758
        %v760 = vpack.c.bf16 %v759, %v759
        %v762 = vsel %vm647, %v760, 0
        %v765 = vsel %vm663, %v598, 0
        %767 = vmatprep.subr.bf16.mxu0 0
        %768 = vmatpush1.bf16.msra.mxu0 %v765
        %769 = vmatprep.subr.bf16.mxu0 0
        %770 = vmatpush1.bf16.msra.mxu0 0
        %771 = vmatprep.subr.bf16.mxu0 0
        %772 = vmatpush1.bf16.msra.mxu0 0
        %773 = vmatprep.subr.bf16.mxu0 0
        %774 = vmatpush1.bf16.msra.mxu0 0
        %775 = vmatprep.subr.bf16.mxu0 0
        %776 = vmatpush1.bf16.msra.mxu0 0
        %777 = vmatprep.subr.bf16.mxu0 0
        %778 = vmatpush1.bf16.msra.mxu0 0
        %779 = vmatprep.subr.bf16.mxu0 0
        %780 = vmatpush1.bf16.msra.mxu0 0
        %781 = vmatprep.subr.bf16.mxu0 0
        %782 = vmatpush1.bf16.msra.mxu0 0
        %783 = vmatprep.subr.bf16.mxu0 0
        %784 = vmatpush1.bf16.msra.mxu0 0
        %785 = vmatprep.subr.bf16.mxu0 0
        %786 = vmatpush1.bf16.msra.mxu0 0
        %787 = vmatprep.subr.bf16.mxu0 0
        %788 = vmatpush1.bf16.msra.mxu0 0
        %789 = vmatprep.subr.bf16.mxu0 0
        %790 = vmatpush1.bf16.msra.mxu0 0
        %791 = vmatprep.subr.bf16.mxu0 0
        %792 = vmatpush1.bf16.msra.mxu0 0
        %793 = vmatprep.subr.bf16.mxu0 0
        %794 = vmatpush1.bf16.msra.mxu0 0
        %795 = vmatprep.subr.bf16.mxu0 0
        %796 = vmatpush1.bf16.msra.mxu0 0
        %797 = vmatprep.subr.bf16.mxu0 0
        %798 = vmatpush1.bf16.msra.mxu0 0
        %799 = vmatprep.mubr.bf16.mxu0 0
        %800 = vmatmul.mubr.bf16.gmra.mrb[0].mxu0 %v762
        %v801 = vpop.f32.mrb[0].mxu0
        %v802 = vadd.f32 0.0, %v801
        %v803 = vpop.f32.mrb[0].mxu0
        %v804 = vpop.f32.mrb[0].mxu0
        %v805 = vpop.f32.mrb[0].mxu0
        %806 = vdwg.mxu0
        %v807 = vpack.c.bf16 %v802, %v802
        %808 = vmatprep.subr.bf16.mxu0 0
        %809 = vmatpush1.bf16.xpose.msra.mxu0 %v595
        %810 = vmatprep.subr.bf16.mxu0 0
        %811 = vmatpush1.bf16.xpose.msra.mxu0 0
        %812 = vmatprep.subr.bf16.mxu0 0
        %813 = vmatpush1.bf16.xpose.msra.mxu0 0
        %814 = vmatprep.subr.bf16.mxu0 0
        %815 = vmatpush1.bf16.xpose.msra.mxu0 0
        %816 = vmatprep.subr.bf16.mxu0 0
        %817 = vmatpush1.bf16.xpose.msra.mxu0 0
        %818 = vmatprep.subr.bf16.mxu0 0
        %819 = vmatpush1.bf16.xpose.msra.mxu0 0
        %820 = vmatprep.subr.bf16.mxu0 0
        %821 = vmatpush1.bf16.xpose.msra.mxu0 0
        %822 = vmatprep.subr.bf16.mxu0 0
        %823 = vmatpush1.bf16.xpose.msra.mxu0 0
        %824 = vmatprep.subr.bf16.mxu0 0
        %825 = vmatpush1.bf16.xpose.msra.mxu0 0
        %826 = vmatprep.subr.bf16.mxu0 0
        %827 = vmatpush1.bf16.xpose.msra.mxu0 0
        %828 = vmatprep.subr.bf16.mxu0 0
        %829 = vmatpush1.bf16.xpose.msra.mxu0 0
        %830 = vmatprep.subr.bf16.mxu0 0
        %831 = vmatpush1.bf16.xpose.msra.mxu0 0
        %832 = vmatprep.subr.bf16.mxu0 0
        %833 = vmatpush1.bf16.xpose.msra.mxu0 0
        %834 = vmatprep.subr.bf16.mxu0 0
        %835 = vmatpush1.bf16.xpose.msra.mxu0 0
        %836 = vmatprep.subr.bf16.mxu0 0
        %837 = vmatpush1.bf16.xpose.msra.mxu0 0
        %838 = vmatprep.subr.bf16.mxu0 0
        %839 = vmatpush1.bf16.xpose.msra.mxu0 0
        %840 = vmatprep.mubr.bf16.mxu0 0
        %841 = vmatmul.mubr.bf16.gmra.mrb[0].mxu0 %v591
        %v842 = vpop.f32.mrb[0].mxu0
        %v843 = vadd.f32 0.0, %v842
        %v844 = vpop.f32.mrb[0].mxu0
        %v845 = vpop.f32.mrb[0].mxu0
        %v846 = vpop.f32.mrb[0].mxu0
        %847 = vdwg.mxu0
        %v848 = vsel %vm605, %v843, -1e+30
        %v849 = vsel %vm647, %v848, -inf
        %850 = vmax.xlane.f32.xlu0 %v849
        %v851 = vpop.xlane.xlu0 %850
        %v852 = vsub.f32 %v848, %v851
        %v853 = vmul.f32 %v852, 1.442695
        %v854 = vpow.pop %v853
        %v855 = vsel %vm647, %v854, 0.0
        %856 = vadd.xlane.f32.xlu0 %v855
        %v857 = vpop.xlane.xlu0 %856
        %v858 = vrcp.pop %v857
        %v859 = vmul.f32 %v854, %v858
        %v860 = vpack.c.bf16 %v859, %v859
        %v862 = vsel %vm647, %v860, 0
        %v865 = vsel %vm663, %v599, 0
        %867 = vmatprep.subr.bf16.mxu0 0
        %868 = vmatpush1.bf16.msra.mxu0 %v865
        %869 = vmatprep.subr.bf16.mxu0 0
        %870 = vmatpush1.bf16.msra.mxu0 0
        %871 = vmatprep.subr.bf16.mxu0 0
        %872 = vmatpush1.bf16.msra.mxu0 0
        %873 = vmatprep.subr.bf16.mxu0 0
        %874 = vmatpush1.bf16.msra.mxu0 0
        %875 = vmatprep.subr.bf16.mxu0 0
        %876 = vmatpush1.bf16.msra.mxu0 0
        %877 = vmatprep.subr.bf16.mxu0 0
        %878 = vmatpush1.bf16.msra.mxu0 0
        %879 = vmatprep.subr.bf16.mxu0 0
        %880 = vmatpush1.bf16.msra.mxu0 0
        %881 = vmatprep.subr.bf16.mxu0 0
        %882 = vmatpush1.bf16.msra.mxu0 0
        %883 = vmatprep.subr.bf16.mxu0 0
        %884 = vmatpush1.bf16.msra.mxu0 0
        %885 = vmatprep.subr.bf16.mxu0 0
        %886 = vmatpush1.bf16.msra.mxu0 0
        %887 = vmatprep.subr.bf16.mxu0 0
        %888 = vmatpush1.bf16.msra.mxu0 0
        %889 = vmatprep.subr.bf16.mxu0 0
        %890 = vmatpush1.bf16.msra.mxu0 0
        %891 = vmatprep.subr.bf16.mxu0 0
        %892 = vmatpush1.bf16.msra.mxu0 0
        %893 = vmatprep.subr.bf16.mxu0 0
        %894 = vmatpush1.bf16.msra.mxu0 0
        %895 = vmatprep.subr.bf16.mxu0 0
        %896 = vmatpush1.bf16.msra.mxu0 0
        %897 = vmatprep.subr.bf16.mxu0 0
        %898 = vmatpush1.bf16.msra.mxu0 0
        %899 = vmatprep.mubr.bf16.mxu0 0
        %900 = vmatmul.mubr.bf16.gmra.mrb[0].mxu0 %v862
        %v901 = vpop.f32.mrb[0].mxu0
        %v902 = vadd.f32 0.0, %v901
        %v903 = vpop.f32.mrb[0].mxu0
        %v904 = vpop.f32.mrb[0].mxu0
        %v905 = vpop.f32.mrb[0].mxu0
        %906 = vdwg.mxu0
        %v907 = vpack.c.bf16 %v902, %v902
        %908 = vmatprep.subr.bf16.mxu0 0
        %909 = vmatpush1.bf16.xpose.msra.mxu0 %v596
        %910 = vmatprep.subr.bf16.mxu0 0
        %911 = vmatpush1.bf16.xpose.msra.mxu0 0
        %912 = vmatprep.subr.bf16.mxu0 0
        %913 = vmatpush1.bf16.xpose.msra.mxu0 0
        %914 = vmatprep.subr.bf16.mxu0 0
        %915 = vmatpush1.bf16.xpose.msra.mxu0 0
        %916 = vmatprep.subr.bf16.mxu0 0
        %917 = vmatpush1.bf16.xpose.msra.mxu0 0
        %918 = vmatprep.subr.bf16.mxu0 0
        %919 = vmatpush1.bf16.xpose.msra.mxu0 0
        %920 = vmatprep.subr.bf16.mxu0 0
        %921 = vmatpush1.bf16.xpose.msra.mxu0 0
        %922 = vmatprep.subr.bf16.mxu0 0
        %923 = vmatpush1.bf16.xpose.msra.mxu0 0
        %924 = vmatprep.subr.bf16.mxu0 0
        %925 = vmatpush1.bf16.xpose.msra.mxu0 0
        %926 = vmatprep.subr.bf16.mxu0 0
        %927 = vmatpush1.bf16.xpose.msra.mxu0 0
        %928 = vmatprep.subr.bf16.mxu0 0
        %929 = vmatpush1.bf16.xpose.msra.mxu0 0
        %930 = vmatprep.subr.bf16.mxu0 0
        %931 = vmatpush1.bf16.xpose.msra.mxu0 0
        %932 = vmatprep.subr.bf16.mxu0 0
        %933 = vmatpush1.bf16.xpose.msra.mxu0 0
        %934 = vmatprep.subr.bf16.mxu0 0
        %935 = vmatpush1.bf16.xpose.msra.mxu0 0
        %936 = vmatprep.subr.bf16.mxu0 0
        %937 = vmatpush1.bf16.xpose.msra.mxu0 0
        %938 = vmatprep.subr.bf16.mxu0 0
        %939 = vmatpush1.bf16.xpose.msra.mxu0 0
        %940 = vmatprep.mubr.bf16.mxu0 0
        %941 = vmatmul.mubr.bf16.gmra.mrb[0].mxu0 %v592
        %v942 = vpop.f32.mrb[0].mxu0
        %v943 = vadd.f32 0.0, %v942
        %v944 = vpop.f32.mrb[0].mxu0
        %v945 = vpop.f32.mrb[0].mxu0
        %v946 = vpop.f32.mrb[0].mxu0
        %947 = vdwg.mxu0
        %v948 = vsel %vm605, %v943, -1e+30
        %v949 = vsel %vm647, %v948, -inf
        %950 = vmax.xlane.f32.xlu0 %v949
        %v951 = vpop.xlane.xlu0 %950
        %v952 = vsub.f32 %v948, %v951
        %v953 = vmul.f32 %v952, 1.442695
        %v954 = vpow.pop %v953
        %v955 = vsel %vm647, %v954, 0.0
        %956 = vadd.xlane.f32.xlu0 %v955
        %v957 = vpop.xlane.xlu0 %956
        %v958 = vrcp.pop %v957
        %v959 = vmul.f32 %v954, %v958
        %v960 = vpack.c.bf16 %v959, %v959
        %v962 = vsel %vm647, %v960, 0
        %v965 = vsel %vm663, %v600, 0
        %967 = vmatprep.subr.bf16.mxu0 0
        %968 = vmatpush1.bf16.msra.mxu0 %v965
        %969 = vmatprep.subr.bf16.mxu0 0
        %970 = vmatpush1.bf16.msra.mxu0 0
        %971 = vmatprep.subr.bf16.mxu0 0
        %972 = vmatpush1.bf16.msra.mxu0 0
        %973 = vmatprep.subr.bf16.mxu0 0
        %974 = vmatpush1.bf16.msra.mxu0 0
        %975 = vmatprep.subr.bf16.mxu0 0
        %976 = vmatpush1.bf16.msra.mxu0 0
        %977 = vmatprep.subr.bf16.mxu0 0
        %978 = vmatpush1.bf16.msra.mxu0 0
        %979 = vmatprep.subr.bf16.mxu0 0
        %980 = vmatpush1.bf16.msra.mxu0 0
        %981 = vmatprep.subr.bf16.mxu0 0
        %982 = vmatpush1.bf16.msra.mxu0 0
        %983 = vmatprep.subr.bf16.mxu0 0
        %984 = vmatpush1.bf16.msra.mxu0 0
        %985 = vmatprep.subr.bf16.mxu0 0
        %986 = vmatpush1.bf16.msra.mxu0 0
        %987 = vmatprep.subr.bf16.mxu0 0
        %988 = vmatpush1.bf16.msra.mxu0 0
        %989 = vmatprep.subr.bf16.mxu0 0
        %990 = vmatpush1.bf16.msra.mxu0 0
        %991 = vmatprep.subr.bf16.mxu0 0
        %992 = vmatpush1.bf16.msra.mxu0 0
        %993 = vmatprep.subr.bf16.mxu0 0
        %994 = vmatpush1.bf16.msra.mxu0 0
        %995 = vmatprep.subr.bf16.mxu0 0
        %996 = vmatpush1.bf16.msra.mxu0 0
        %997 = vmatprep.subr.bf16.mxu0 0
        %998 = vmatpush1.bf16.msra.mxu0 0
        %999 = vmatprep.mubr.bf16.mxu0 0
        %1000 = vmatmul.mubr.bf16.gmra.mrb[0].mxu0 %v962
        %v1001 = vpop.f32.mrb[0].mxu0
        %v1002 = vadd.f32 0.0, %v1001
        %v1003 = vpop.f32.mrb[0].mxu0
        %v1004 = vpop.f32.mrb[0].mxu0
        %v1005 = vpop.f32.mrb[0].mxu0
        %1006 = vdwg.mxu0
        %v1007 = vpack.c.bf16 %v1002, %v1002
        %v1008 = vld [vmem:[%s2] sm:$0xf]
        %v1009 = vld [vmem:[%s2 + $0x4] sm:$0xf]
        %v1010 = vld [vmem:[%s2 + $0x8] sm:$0xf]
        %v1011 = vld [vmem:[%s2 + $0xc] sm:$0xf]
        %v1012 = vld [vmem:[%s2 + $0x10] sm:$0xf]
        %v1013 = vld [vmem:[%s2 + $0x14] sm:$0xf]
        %v1014 = vld [vmem:[%s2 + $0x18] sm:$0xf]
        %v1015 = vld [vmem:[%s2 + $0x1c] sm:$0xf]
        %v1016 = vld [vmem:[%s2 + $0x20] sm:$0xf]
        %v1017 = vld [vmem:[%s2 + $0x24] sm:$0xf]
        %v1018 = vld [vmem:[%s2 + $0x28] sm:$0xf]
        %v1019 = vld [vmem:[%s2 + $0x2c] sm:$0xf]
        %v1020 = vld [vmem:[%s2 + $0x30] sm:$0xf]
        %v1021 = vld [vmem:[%s2 + $0x34] sm:$0xf]
        %v1022 = vld [vmem:[%s2 + $0x38] sm:$0xf]
        %v1023 = vld [vmem:[%s2 + $0x3c] sm:$0xf]
        %v1024 = vld [vmem:[%s2 + $0x40] sm:$0xf]
        %v1025 = vld [vmem:[%s2 + $0x44] sm:$0xf]
        %v1026 = vld [vmem:[%s2 + $0x48] sm:$0xf]
        %v1027 = vld [vmem:[%s2 + $0x4c] sm:$0xf]
        %v1028 = vld [vmem:[%s2 + $0x50] sm:$0xf]
        %v1029 = vld [vmem:[%s2 + $0x54] sm:$0xf]
        %v1030 = vld [vmem:[%s2 + $0x58] sm:$0xf]
        %v1031 = vld [vmem:[%s2 + $0x5c] sm:$0xf]
        %v1032 = vld [vmem:[%s2 + $0x60] sm:$0xf]
        %v1033 = vld [vmem:[%s2 + $0x64] sm:$0xf]
        %v1034 = vld [vmem:[%s2 + $0x68] sm:$0xf]
        %v1035 = vld [vmem:[%s2 + $0x6c] sm:$0xf]
        %v1036 = vld [vmem:[%s2 + $0x70] sm:$0xf]
        %v1037 = vld [vmem:[%s2 + $0x74] sm:$0xf]
        %v1038 = vld [vmem:[%s2 + $0x78] sm:$0xf]
        %v1039 = vld [vmem:[%s2 + $0x7c] sm:$0xf]
        %v1040 = vld [vmem:[%s2 + $0x80] sm:$0xf]
        %v1041 = vld [vmem:[%s2 + $0x84] sm:$0xf]
        %v1042 = vld [vmem:[%s2 + $0x88] sm:$0xf]
        %v1043 = vld [vmem:[%s2 + $0x8c] sm:$0xf]
        %v1044 = vld [vmem:[%s2 + $0x90] sm:$0xf]
        %v1045 = vld [vmem:[%s2 + $0x94] sm:$0xf]
        %v1046 = vld [vmem:[%s2 + $0x98] sm:$0xf]
        %v1047 = vld [vmem:[%s2 + $0x9c] sm:$0xf]
        %v1048 = vld [vmem:[%s2 + $0xa0] sm:$0xf]
        %v1049 = vld [vmem:[%s2 + $0xa4] sm:$0xf]
        %v1050 = vld [vmem:[%s2 + $0xa8] sm:$0xf]
        %v1051 = vld [vmem:[%s2 + $0xac] sm:$0xf]
        %v1052 = vld [vmem:[%s2 + $0xb0] sm:$0xf]
        %v1053 = vld [vmem:[%s2 + $0xb4] sm:$0xf]
        %v1054 = vld [vmem:[%s2 + $0xb8] sm:$0xf]
        %v1055 = vld [vmem:[%s2 + $0xbc] sm:$0xf]
        %v1056 = vld [vmem:[%s2 + $0xc0] sm:$0xf]
        %v1057 = vld [vmem:[%s2 + $0xc4] sm:$0xf]
        %v1058 = vld [vmem:[%s2 + $0xc8] sm:$0xf]
        %v1059 = vld [vmem:[%s2 + $0xcc] sm:$0xf]
        %v1060 = vld [vmem:[%s2 + $0xd0] sm:$0xf]
        %v1061 = vld [vmem:[%s2 + $0xd4] sm:$0xf]
        %v1062 = vld [vmem:[%s2 + $0xd8] sm:$0xf]
        %v1063 = vld [vmem:[%s2 + $0xdc] sm:$0xf]
        %v1064 = vld [vmem:[%s2 + $0xe0] sm:$0xf]
        %v1065 = vld [vmem:[%s2 + $0xe4] sm:$0xf]
        %v1066 = vld [vmem:[%s2 + $0xe8] sm:$0xf]
        %v1067 = vld [vmem:[%s2 + $0xec] sm:$0xf]
        %v1068 = vld [vmem:[%s2 + $0xf0] sm:$0xf]
        %v1069 = vld [vmem:[%s2 + $0xf4] sm:$0xf]
        %v1070 = vld [vmem:[%s2 + $0xf8] sm:$0xf]
        %v1071 = vld [vmem:[%s2 + $0xfc] sm:$0xf]
        %v1072 = vld [vmem:[%s3] sm:$0x1]
        %v1074 = vlaneseq
        %v1075 = vshrl.u32 %v1074, 7
        %v1076 = vsub.s32 0, %v1075
        %v1077 = vrot.slane %v1072, %v1076
        %v1143 = vunpack.c.l.b16 %v1008
        %v1144 = vunpack.c.l.b16 %v1009
        %v1145 = vunpack.c.l.b16 %v1010
        %v1146 = vunpack.c.l.b16 %v1011
        %v1147 = vunpack.c.l.b16 %v1012
        %v1148 = vunpack.c.l.b16 %v1013
        %v1149 = vunpack.c.l.b16 %v1014
        %v1150 = vunpack.c.l.b16 %v1015
        %v1151 = vunpack.c.l.b16 %v1016
        %v1152 = vunpack.c.l.b16 %v1017
        %v1153 = vunpack.c.l.b16 %v1018
        %v1154 = vunpack.c.l.b16 %v1019
        %v1155 = vunpack.c.l.b16 %v1020
        %v1156 = vunpack.c.l.b16 %v1021
        %v1157 = vunpack.c.l.b16 %v1022
        %v1158 = vunpack.c.l.b16 %v1023
        %v1159 = vunpack.c.l.b16 %v1024
        %v1160 = vunpack.c.l.b16 %v1025
        %v1161 = vunpack.c.l.b16 %v1026
        %v1162 = vunpack.c.l.b16 %v1027
        %v1163 = vunpack.c.l.b16 %v1028
        %v1164 = vunpack.c.l.b16 %v1029
        %v1165 = vunpack.c.l.b16 %v1030
        %v1166 = vunpack.c.l.b16 %v1031
        %v1167 = vunpack.c.l.b16 %v1032
        %v1168 = vunpack.c.l.b16 %v1033
        %v1169 = vunpack.c.l.b16 %v1034
        %v1170 = vunpack.c.l.b16 %v1035
        %v1171 = vunpack.c.l.b16 %v1036
        %v1172 = vunpack.c.l.b16 %v1037
        %v1173 = vunpack.c.l.b16 %v1038
        %v1174 = vunpack.c.l.b16 %v1039
        %v1175 = vunpack.c.l.b16 %v1040
        %v1176 = vunpack.c.l.b16 %v1041
        %v1177 = vunpack.c.l.b16 %v1042
        %v1178 = vunpack.c.l.b16 %v1043
        %v1179 = vunpack.c.l.b16 %v1044
        %v1180 = vunpack.c.l.b16 %v1045
        %v1181 = vunpack.c.l.b16 %v1046
        %v1182 = vunpack.c.l.b16 %v1047
        %v1183 = vunpack.c.l.b16 %v1048
        %v1184 = vunpack.c.l.b16 %v1049
        %v1185 = vunpack.c.l.b16 %v1050
        %v1186 = vunpack.c.l.b16 %v1051
        %v1187 = vunpack.c.l.b16 %v1052
        %v1188 = vunpack.c.l.b16 %v1053
        %v1189 = vunpack.c.l.b16 %v1054
        %v1190 = vunpack.c.l.b16 %v1055
        %v1191 = vunpack.c.l.b16 %v1056
        %v1192 = vunpack.c.l.b16 %v1057
        %v1193 = vunpack.c.l.b16 %v1058
        %v1194 = vunpack.c.l.b16 %v1059
        %v1195 = vunpack.c.l.b16 %v1060
        %v1196 = vunpack.c.l.b16 %v1061
        %v1197 = vunpack.c.l.b16 %v1062
        %v1198 = vunpack.c.l.b16 %v1063
        %v1199 = vunpack.c.l.b16 %v1064
        %v1200 = vunpack.c.l.b16 %v1065
        %v1201 = vunpack.c.l.b16 %v1066
        %v1202 = vunpack.c.l.b16 %v1067
        %v1203 = vunpack.c.l.b16 %v1068
        %v1204 = vunpack.c.l.b16 %v1069
        %v1205 = vunpack.c.l.b16 %v1070
        %v1206 = vunpack.c.l.b16 %v1071
        %v1207 = vpack.c.b16 %v1144, %v1143
        %v1208 = vpack.c.b16 %v1146, %v1145
        %v1209 = vpack.c.b16 %v1148, %v1147
        %v1210 = vpack.c.b16 %v1150, %v1149
        %v1211 = vpack.c.b16 %v1152, %v1151
        %v1212 = vpack.c.b16 %v1154, %v1153
        %v1213 = vpack.c.b16 %v1156, %v1155
        %v1214 = vpack.c.b16 %v1158, %v1157
        %v1215 = vpack.c.b16 %v1160, %v1159
        %v1216 = vpack.c.b16 %v1162, %v1161
        %v1217 = vpack.c.b16 %v1164, %v1163
        %v1218 = vpack.c.b16 %v1166, %v1165
        %v1219 = vpack.c.b16 %v1168, %v1167
        %v1220 = vpack.c.b16 %v1170, %v1169
        %v1221 = vpack.c.b16 %v1172, %v1171
        %v1222 = vpack.c.b16 %v1174, %v1173
        %v1223 = vpack.c.b16 %v1176, %v1175
        %v1224 = vpack.c.b16 %v1178, %v1177
        %v1225 = vpack.c.b16 %v1180, %v1179
        %v1226 = vpack.c.b16 %v1182, %v1181
        %v1227 = vpack.c.b16 %v1184, %v1183
        %v1228 = vpack.c.b16 %v1186, %v1185
        %v1229 = vpack.c.b16 %v1188, %v1187
        %v1230 = vpack.c.b16 %v1190, %v1189
        %v1231 = vpack.c.b16 %v1192, %v1191
        %v1232 = vpack.c.b16 %v1194, %v1193
        %v1233 = vpack.c.b16 %v1196, %v1195
        %v1234 = vpack.c.b16 %v1198, %v1197
        %v1235 = vpack.c.b16 %v1200, %v1199
        %v1236 = vpack.c.b16 %v1202, %v1201
        %v1237 = vpack.c.b16 %v1204, %v1203
        %v1238 = vpack.c.b16 %v1206, %v1205
        %1271 = vmatprep.subr.bf16.mxu0 0
        %1272 = vmatpush1.bf16.msra.mxu0 %v1207
        %1273 = vmatprep.subr.bf16.mxu0 0
        %1274 = vmatpush1.bf16.msra.mxu0 %v1208
        %1275 = vmatprep.subr.bf16.mxu0 0
        %1276 = vmatpush1.bf16.msra.mxu0 %v1209
        %1277 = vmatprep.subr.bf16.mxu0 0
        %1278 = vmatpush1.bf16.msra.mxu0 %v1210
        %1279 = vmatprep.subr.bf16.mxu0 0
        %1280 = vmatpush1.bf16.msra.mxu0 %v1211
        %1281 = vmatprep.subr.bf16.mxu0 0
        %1282 = vmatpush1.bf16.msra.mxu0 %v1212
        %1283 = vmatprep.subr.bf16.mxu0 0
        %1284 = vmatpush1.bf16.msra.mxu0 %v1213
        %1285 = vmatprep.subr.bf16.mxu0 0
        %1286 = vmatpush1.bf16.msra.mxu0 %v1214
        %1287 = vmatprep.subr.bf16.mxu0 0
        %1288 = vmatpush1.bf16.msra.mxu0 %v1215
        %1289 = vmatprep.subr.bf16.mxu0 0
        %1290 = vmatpush1.bf16.msra.mxu0 %v1216
        %1291 = vmatprep.subr.bf16.mxu0 0
        %1292 = vmatpush1.bf16.msra.mxu0 %v1217
        %1293 = vmatprep.subr.bf16.mxu0 0
        %1294 = vmatpush1.bf16.msra.mxu0 %v1218
        %1295 = vmatprep.subr.bf16.mxu0 0
        %1296 = vmatpush1.bf16.msra.mxu0 %v1219
        %1297 = vmatprep.subr.bf16.mxu0 0
        %1298 = vmatpush1.bf16.msra.mxu0 %v1220
        %1299 = vmatprep.subr.bf16.mxu0 0
        %1300 = vmatpush1.bf16.msra.mxu0 %v1221
        %1301 = vmatprep.subr.bf16.mxu0 0
        %1302 = vmatpush1.bf16.msra.mxu0 %v1222
        %1303 = vmatprep.mubr.bf16.mxu0 %v807
        %1304 = vmatmul.mubr.bf16.gmra.mrb[0].mxu0 %v707
        %v1305 = vpop.f32.mrb[0].mxu0
        %v1306 = vadd.f32 %v1077, %v1305
        %v1307 = vpop.f32.mrb[0].mxu0
        %v1308 = vpop.f32.mrb[0].mxu0
        %v1309 = vpop.f32.mrb[0].mxu0
        %1310 = vdwg.mxu0
        %1311 = vmatprep.subr.bf16.mxu0 0
        %1312 = vmatpush1.bf16.msra.mxu0 %v1223
        %1313 = vmatprep.subr.bf16.mxu0 0
        %1314 = vmatpush1.bf16.msra.mxu0 %v1224
        %1315 = vmatprep.subr.bf16.mxu0 0
        %1316 = vmatpush1.bf16.msra.mxu0 %v1225
        %1317 = vmatprep.subr.bf16.mxu0 0
        %1318 = vmatpush1.bf16.msra.mxu0 %v1226
        %1319 = vmatprep.subr.bf16.mxu0 0
        %1320 = vmatpush1.bf16.msra.mxu0 %v1227
        %1321 = vmatprep.subr.bf16.mxu0 0
        %1322 = vmatpush1.bf16.msra.mxu0 %v1228
        %1323 = vmatprep.subr.bf16.mxu0 0
        %1324 = vmatpush1.bf16.msra.mxu0 %v1229
        %1325 = vmatprep.subr.bf16.mxu0 0
        %1326 = vmatpush1.bf16.msra.mxu0 %v1230
        %1327 = vmatprep.subr.bf16.mxu0 0
        %1328 = vmatpush1.bf16.msra.mxu0 %v1231
        %1329 = vmatprep.subr.bf16.mxu0 0
        %1330 = vmatpush1.bf16.msra.mxu0 %v1232
        %1331 = vmatprep.subr.bf16.mxu0 0
        %1332 = vmatpush1.bf16.msra.mxu0 %v1233
        %1333 = vmatprep.subr.bf16.mxu0 0
        %1334 = vmatpush1.bf16.msra.mxu0 %v1234
        %1335 = vmatprep.subr.bf16.mxu0 0
        %1336 = vmatpush1.bf16.msra.mxu0 %v1235
        %1337 = vmatprep.subr.bf16.mxu0 0
        %1338 = vmatpush1.bf16.msra.mxu0 %v1236
        %1339 = vmatprep.subr.bf16.mxu0 0
        %1340 = vmatpush1.bf16.msra.mxu0 %v1237
        %1341 = vmatprep.subr.bf16.mxu0 0
        %1342 = vmatpush1.bf16.msra.mxu0 %v1238
        %1343 = vmatprep.mubr.bf16.mxu0 %v1007
        %1344 = vmatmul.mubr.bf16.gmra.mrb[0].mxu0 %v907
        %v1345 = vpop.f32.mrb[0].mxu0
        %v1346 = vadd.f32 %v1306, %v1345
        %v1347 = vpop.f32.mrb[0].mxu0
        %v1348 = vpop.f32.mrb[0].mxu0
        %v1349 = vpop.f32.mrb[0].mxu0
        %1350 = vdwg.mxu0
        %v1351 = vpack.c.bf16 %v1346, %v1346
        %vm1352 = vcmask 257024
        %1353 = vst.msk [vmem:[%s188] sm:$0xf] %vm1352, %v1351
        %s1354 = sand.u32 %s115, 1
        %s1355 = scalar_lea.sflag [#allocation3], %s1354
        %s1356 = sand.u32 %s115, 1
        %s1357 = smul.addr %s1356, 4
        %s1358 = scalar_lea.vmem [#allocation2], %s1357
        // Predicated region
        $region37: #{tpu_custom_call.1} parent=35 // pred_check
          %p1359 = pneg %p125
        $region38: #{tpu_custom_call.1} parent=35 // pred_check_branch
          %1361 = sbr.rel (%p1359) target = $region40
        $region39: #{tpu_custom_call.1} parent=35 // pred_region
          %s1363 = ssub.s32 64, 64
          %1364 = vsyncadd %s1355, %s1363
          %s1365 = smul.addr %s18, 64
          %s1366 = scalar_lea.hbm %s4, %s1365
          %s1368 = sshll.u32 %s1358, 4
          %s1369 = int_to_ptr.vmem [resolvable:$true] %s1368
          %1371 = dma.vmem_to_hbm [thread:$0]  %s1369, 64, %s1366, %s1355
        $region40: #{tpu_custom_call.1} parent=35 // pred_fallthru
          _
      $region36: #{tpu_custom_call.1} parent=5 // pred_fallthru
        _
      %p1372 = scmp.le.s32.totalorder 2, %s13
      // Predicated region
      $region41: #{tpu_custom_call.1} parent=5 // pred_check
        %p1373 = pneg %p1372
      $region42: #{tpu_custom_call.1} parent=5 // pred_check_branch
        %1375 = sbr.rel (%p1373) target = $region44
      $region43: #{tpu_custom_call.1} parent=5 // pred_region
        %s1376 = ssub.s32 %s13, 2
        // Predicated region
        $region45: #{tpu_custom_call.1} parent=43 // pred_check
          %p1377 = pneg %p131
        $region46: #{tpu_custom_call.1} parent=43 // pred_check_branch
          %1379 = sbr.rel (%p1377) target = $region48
        $region47: #{tpu_custom_call.1} parent=43 // pred_region
          %s1380 = sand.u32 %s116, 1
          %s1381 = scalar_lea.sflag [#allocation3], %s1380
          %s1382 = sand.u32 %s116, 1
          %s1383 = smul.addr %s1382, 4
          %s1384 = scalar_lea.vmem [#allocation2], %s1383
          %1385 = dma.done %s1381, 64
        $region48: #{tpu_custom_call.1} parent=43 // pred_fallthru
          _
      $region44: #{tpu_custom_call.1} parent=5 // pred_fallthru
        _
    $region6: #{tpu_custom_call.1} parent=1 // loop_footer
      %s17 = sadd.s32 1, %s13
    $region7: #{tpu_custom_call.1} parent=1 // loop_footer_branch
      %12 = sbr.rel target = $region3
    $region8: #{tpu_custom_call.1} parent=1 // loop_exit
      _
    %1386 = vsyncpa [#allocation3], 1
    %s1387 = scalar_lea.sflag [#allocation3], 1
    %1388 = vsyncpa %s1387, 1

</llo_original>
